<compile_context>
chip_gen: v7x
topology: tpu7x:2x2x1
jax: 0.10.0
libtpu: 0.0.40
codegen_flags: <defaults>
</compile_context>

<pallas_src>
import functools
import math

import jax
import jax.numpy as jnp
from jax.experimental import pallas as pl
from jax.experimental.pallas import tpu as pltpu


def _round_up(v, m):
    return (v + m - 1) // m * m


def _cdiv(a, b):
    return -(-a // b)


def _resblock_kernel(x_ref, w_ref, b_ref, o_ref, acc_ref, *, rh, wout, n_chunks):
    """relu(conv3x3(x) + bias + x) for one padded image, chunked over rows.

    x_ref : (Hp+2, Wpad, Cp)   padded NHWC image (VMEM, auto-pipelined)
    w_ref : (3, 3*Cp, Cp)      per-ky tap weights, kx packed along contraction
    b_ref : (1, Cp)            f32 bias row
    o_ref : (Hp*Wout, Cp)      flat lane-dense output slab
    acc_ref: (rh*Wout, Cp)     f32 VMEM accumulator scratch
    """
    cp3 = w_ref.shape[1]          # 3 * padded Cin
    pc = w_ref.shape[2]           # padded Cout
    cpin = cp3 // 3
    assert cpin == pc             # residual add requires Cin == Cout
    tm = rh * wout

    for ci in range(n_chunks):                                  # static unroll
        r0 = ci * rh
        xt = x_ref[r0:r0 + rh + 2]                               # (rh+2, Wpad, Cp)

        # kx-shifted windows packed along lanes: 3 copies total (not 9).
        xs = jnp.concatenate(
            [xt[:, 0:wout, :], xt[:, 1:wout + 1, :], xt[:, 2:wout + 2, :]],
            axis=-1)                                             # (rh+2, Wout, 3*Cp)

        # One MXU matmul per ky with contraction depth 3*Cp, f32 accumulate
        # into a VMEM scratch.
        acc_ref[...] = jnp.dot(xs[0:rh].reshape(tm, cp3), w_ref[0],
                               preferred_element_type=jnp.float32)
        acc_ref[...] += jnp.dot(xs[1:rh + 1].reshape(tm, cp3), w_ref[1],
                                preferred_element_type=jnp.float32)
        acc_ref[...] += jnp.dot(xs[2:rh + 2].reshape(tm, cp3), w_ref[2],
                                preferred_element_type=jnp.float32)

        # Residual from the resident tile center; padded channels stay zero.
        resid = xt[1:rh + 1, 1:1 + wout, :].reshape(tm, cpin).astype(jnp.float32)

        out = acc_ref[...] + b_ref[...] + resid
        o_ref[r0 * wout:r0 * wout + tm, :] = jnp.maximum(out, 0.0).astype(o_ref.dtype)


def residual_block(x_nchw, conv_w, conv_b, *, compute_dtype=jnp.bfloat16,
                   chunk_rows_target=1024):
    """relu(conv3x3(x) + x); x NCHW, conv_w (Cout, Cin, 3, 3), conv_b (Cout,)."""
    bsz, ch, hh, ww = x_nchw.shape
    cout, cin, kh, kw = conv_w.shape
    assert (cin, kh, kw) == (ch, 3, 3), "expected a 3x3 conv with Cin == C"
    assert cout == ch, "residual add requires matching channel count"

    out_dtype = x_nchw.dtype
    pc = _round_up(ch, 128)              # lane-padded channels (Cin == Cout)
    wpad = _round_up(ww + 2, 8)          # sublane-aligned padded image width

    # In-kernel row-chunk height: multiple of `base` so chunk output stores are
    # sublane-aligned; ~chunk_rows_target output rows per chunk; bounded unroll.
    base = 8 // math.gcd(ww, 8)
    rh = base
    while rh * ww < chunk_rows_target and rh < hh:
        rh += base
    while _cdiv(hh, rh) > 32:
        rh += base
    hp = _round_up(hh, rh)               # padded tail rows instead of divisor req.
    n_chunks = hp // rh
    tm = rh * ww

    # NCHW -> NHWC; 1-row halo top, (1 + tail-pad) bottom, 1-col left halo,
    # right pad to a multiple of 8 sublanes, channels padded to 128 lanes.
    x_nhwc = jnp.transpose(x_nchw, (0, 2, 3, 1)).astype(compute_dtype)
    xp = jnp.pad(x_nhwc, ((0, 0), (1, 1 + hp - hh), (1, wpad - ww - 1),
                          (0, pc - ch)))                        # (N, Hp+2, Wpad, Cp)

    # PyTorch conv weight (Cout, Cin, 3, 3) -> per-ky (3, 3*Cp, Cp): the three
    # kx taps are packed along the contraction dim so each matmul is K = 3*Cp.
    w_t = jnp.transpose(conv_w, (2, 3, 1, 0))                    # (3, 3, Cin, Cout)
    w_t = jnp.pad(w_t, ((0, 0), (0, 0), (0, pc - ch), (0, pc - cout)))
    w_packed = w_t.reshape(3, 3 * pc, pc).astype(compute_dtype)
    b_row = jnp.pad(conv_b, (0, pc - cout)).reshape(1, pc).astype(jnp.float32)

    kernel = functools.partial(_resblock_kernel, rh=rh, wout=ww,
                               n_chunks=n_chunks)

    # VMEM budget estimate; raise the scoped limit only when needed (cap 48 MiB).
    itm = jnp.dtype(compute_dtype).itemsize
    oitm = jnp.dtype(out_dtype).itemsize
    in_blk = (hp + 2) * wpad * pc * itm
    out_blk = hp * ww * pc * oitm
    w_blk = 9 * pc * pc * itm + pc * 4
    tmp_blk = (rh + 2) * (wpad + 3 * ww) * pc * itm + 2 * tm * pc * 4
    vmem_est = 2 * (in_blk + out_blk + w_blk) + tm * pc * 4 + tmp_blk
    cparams = dict(dimension_semantics=("parallel",))
    if vmem_est > (16 << 20):
        cparams["vmem_limit_bytes"] = int(min(max(vmem_est * 3 // 2, 32 << 20),
                                              48 << 20))

    out_flat = pl.pallas_call(
        kernel,
        out_shape=jax.ShapeDtypeStruct((bsz, hp * ww, pc), out_dtype),
        grid=(bsz,),
        in_specs=[
            pl.BlockSpec((None, hp + 2, wpad, pc), lambda b: (b, 0, 0, 0)),
            pl.BlockSpec((3, 3 * pc, pc), lambda b: (0, 0, 0)),   # pinned weights
            pl.BlockSpec((1, pc), lambda b: (0, 0)),              # pinned bias
        ],
        out_specs=pl.BlockSpec((None, hp * ww, pc), lambda b: (b, 0, 0)),
        scratch_shapes=[pltpu.VMEM((tm, pc), jnp.float32)],
        compiler_params=pltpu.CompilerParams(**cparams),
    )(xp, w_packed, b_row)

    out = out_flat.reshape(bsz, hp, ww, pc)[:, :hh, :, :cout]
    return jnp.transpose(out, (0, 3, 1, 2))                       # NHWC -> NCHW


def _reference(x_nchw, conv_w, conv_b):
    y = jax.lax.conv_general_dilated(
        x_nchw, conv_w, window_strides=(1, 1), padding=((1, 1), (1, 1)),
        dimension_numbers=("NCHW", "OIHW", "NCHW"))
    y = y + conv_b.reshape(1, -1, 1, 1)
    return jnp.maximum(y + x_nchw, 0.0)


if __name__ == "__main__":
    key = jax.random.PRNGKey(0)
    kx, kw_, kb = jax.random.split(key, 3)

    N, C, H, W = 2, 4, 16, 16
    # Inputs quantized to bf16-exact grids (multiples of 1/8 and 1/64) so both
    # the f32 and the bf16 compute paths are bit-exact vs the XLA reference,
    # making the correctness check independent of MXU matmul precision.
    x = jnp.round(jax.random.normal(kx, (N, C, H, W), dtype=jnp.float32) * 8.0) / 8.0
    conv_w = jnp.round(jax.random.normal(kw_, (C, C, 3, 3), dtype=jnp.float32) * 8.0) / 64.0
    conv_b = jnp.round(jax.random.normal(kb, (C,), dtype=jnp.float32) * 16.0) / 64.0

    ref = _reference(x, conv_w, conv_b)

    # f32 compute path (tight check).
    out32 = jax.block_until_ready(
        residual_block(x, conv_w, conv_b, compute_dtype=jnp.float32))
    assert out32.shape == (N, C, H, W)
    assert jnp.allclose(out32, ref, atol=1e-5, rtol=1e-5), "f32 mismatch vs reference"

    # Production default: bf16 activations/weights with f32 MXU accumulation.
    outbf = jax.block_until_ready(residual_block(x, conv_w, conv_b))
    assert outbf.shape == (N, C, H, W)
    assert jnp.allclose(outbf, ref, atol=1e-5, rtol=1e-5), "bf16 mismatch vs reference"

    print("KERNEL_OK")
</pallas_src>

<mosaic_0001>
module attributes {stable_mosaic.version = 11 : i64} {
  func.func @_resblock_kernel(%arg0: i32, %arg1: memref<1x18x24x128xf32, #tpu.memory_space<vmem>>, %arg2: memref<3x384x128xf32, #tpu.memory_space<vmem>>, %arg3: memref<1x128xf32, #tpu.memory_space<vmem>>, %arg4: memref<1x256x128xf32, #tpu.memory_space<vmem>>, %arg5: memref<256x128xf32, #tpu.memory_space<vmem>>) attributes {dimension_semantics = [#tpu.dimension_semantics<parallel>], iteration_bounds = array<i64: 2>, scalar_prefetch = 0 : i64, scratch_operands = 1 : i64, tpu.core_type = #tpu.core_type<tc>, window_params = [{transform_indices = @transform_0, window_bounds = array<i64: 1, 18, 24, 128>}, {pipeline_mode = #tpu.pipeline_mode<synchronous>, transform_indices = @transform_1, window_bounds = array<i64: 3, 384, 128>}, {pipeline_mode = #tpu.pipeline_mode<synchronous>, transform_indices = @transform_2, window_bounds = array<i64: 1, 128>}, {transform_indices = @transform_3, window_bounds = array<i64: 1, 256, 128>}]} {
    %c0 = arith.constant 0 : index
    %c0_0 = arith.constant 0 : index
    %c0_1 = arith.constant 0 : index
    %c0_2 = arith.constant 0 : index
    %0 = vector.load %arg1[%c0, %c0_0, %c0_1, %c0_2] : memref<1x18x24x128xf32, #tpu.memory_space<vmem>>, vector<1x18x24x128xf32>
    %1 = vector.shape_cast %0 : vector<1x18x24x128xf32> to vector<18x24x128xf32>
    %2 = vector.extract_strided_slice %1 {offsets = [0, 0, 0], sizes = [18, 16, 128], strides = [1, 1, 1]} : vector<18x24x128xf32> to vector<18x16x128xf32>
    %3 = vector.extract_strided_slice %1 {offsets = [0, 1, 0], sizes = [18, 16, 128], strides = [1, 1, 1]} : vector<18x24x128xf32> to vector<18x16x128xf32>
    %4 = vector.extract_strided_slice %1 {offsets = [0, 2, 0], sizes = [18, 16, 128], strides = [1, 1, 1]} : vector<18x24x128xf32> to vector<18x16x128xf32>
    %5 = tpu.concatenate %2, %3, %4 in 2 : vector<18x16x128xf32>, vector<18x16x128xf32>, vector<18x16x128xf32> -> vector<18x16x384xf32>
    %6 = vector.extract_strided_slice %5 {offsets = [0, 0, 0], sizes = [16, 16, 384], strides = [1, 1, 1]} : vector<18x16x384xf32> to vector<16x16x384xf32>
    %7 = vector.shape_cast %6 : vector<16x16x384xf32> to vector<256x384xf32>
    %c0_3 = arith.constant 0 : index
    %c0_4 = arith.constant 0 : index
    %c0_5 = arith.constant 0 : index
    %8 = vector.load %arg2[%c0_3, %c0_4, %c0_5] : memref<3x384x128xf32, #tpu.memory_space<vmem>>, vector<1x384x128xf32>
    %9 = vector.shape_cast %8 : vector<1x384x128xf32> to vector<384x128xf32>
    %cst = arith.constant dense<0.000000e+00> : vector<256x128xf32>
    %10 = tpu.matmul %7, %9, %cst {dimension_numbers = #tpu.dot_dimension_numbers<[1], [0], [0], [1], [0, 0, 1, 1], [], []>} : vector<256x384xf32>, vector<384x128xf32>, vector<256x128xf32> -> vector<256x128xf32>
    %c0_6 = arith.constant 0 : index
    %c0_7 = arith.constant 0 : index
    %11 = vector.load %arg5[%c0_6, %c0_7] : memref<256x128xf32, #tpu.memory_space<vmem>>, vector<256x128xf32>
    tpu.vector_store %arg5[%c0_6, %c0_7], %10 {strides = array<i32>} : memref<256x128xf32, #tpu.memory_space<vmem>>, vector<256x128xf32>,
    %c0_8 = arith.constant 0 : index
    %c0_9 = arith.constant 0 : index
    %12 = vector.load %arg5[%c0_8, %c0_9] : memref<256x128xf32, #tpu.memory_space<vmem>>, vector<256x128xf32>
    %13 = vector.extract_strided_slice %5 {offsets = [1, 0, 0], sizes = [16, 16, 384], strides = [1, 1, 1]} : vector<18x16x384xf32> to vector<16x16x384xf32>
    %14 = vector.shape_cast %13 : vector<16x16x384xf32> to vector<256x384xf32>
    %c1 = arith.constant 1 : index
    %c0_10 = arith.constant 0 : index
    %c0_11 = arith.constant 0 : index
    %15 = vector.load %arg2[%c1, %c0_10, %c0_11] : memref<3x384x128xf32, #tpu.memory_space<vmem>>, vector<1x384x128xf32>
    %16 = vector.shape_cast %15 : vector<1x384x128xf32> to vector<384x128xf32>
    %cst_12 = arith.constant dense<0.000000e+00> : vector<256x128xf32>
    %17 = tpu.matmul %14, %16, %cst_12 {dimension_numbers = #tpu.dot_dimension_numbers<[1], [0], [0], [1], [0, 0, 1, 1], [], []>} : vector<256x384xf32>, vector<384x128xf32>, vector<256x128xf32> -> vector<256x128xf32>
    %18 = arith.addf %12, %17 : vector<256x128xf32>
    %c0_13 = arith.constant 0 : index
    %c0_14 = arith.constant 0 : index
    %19 = vector.load %arg5[%c0_13, %c0_14] : memref<256x128xf32, #tpu.memory_space<vmem>>, vector<256x128xf32>
    tpu.vector_store %arg5[%c0_13, %c0_14], %18 {strides = array<i32>} : memref<256x128xf32, #tpu.memory_space<vmem>>, vector<256x128xf32>,
    %c0_15 = arith.constant 0 : index
    %c0_16 = arith.constant 0 : index
    %20 = vector.load %arg5[%c0_15, %c0_16] : memref<256x128xf32, #tpu.memory_space<vmem>>, vector<256x128xf32>
    %21 = vector.extract_strided_slice %5 {offsets = [2, 0, 0], sizes = [16, 16, 384], strides = [1, 1, 1]} : vector<18x16x384xf32> to vector<16x16x384xf32>
    %22 = vector.shape_cast %21 : vector<16x16x384xf32> to vector<256x384xf32>
    %c2 = arith.constant 2 : index
    %c0_17 = arith.constant 0 : index
    %c0_18 = arith.constant 0 : index
    %23 = vector.load %arg2[%c2, %c0_17, %c0_18] : memref<3x384x128xf32, #tpu.memory_space<vmem>>, vector<1x384x128xf32>
    %24 = vector.shape_cast %23 : vector<1x384x128xf32> to vector<384x128xf32>
    %cst_19 = arith.constant dense<0.000000e+00> : vector<256x128xf32>
    %25 = tpu.matmul %22, %24, %cst_19 {dimension_numbers = #tpu.dot_dimension_numbers<[1], [0], [0], [1], [0, 0, 1, 1], [], []>} : vector<256x384xf32>, vector<384x128xf32>, vector<256x128xf32> -> vector<256x128xf32>
    %26 = arith.addf %20, %25 : vector<256x128xf32>
    %c0_20 = arith.constant 0 : index
    %c0_21 = arith.constant 0 : index
    %27 = vector.load %arg5[%c0_20, %c0_21] : memref<256x128xf32, #tpu.memory_space<vmem>>, vector<256x128xf32>
    tpu.vector_store %arg5[%c0_20, %c0_21], %26 {strides = array<i32>} : memref<256x128xf32, #tpu.memory_space<vmem>>, vector<256x128xf32>,
    %28 = vector.extract_strided_slice %1 {offsets = [1, 1, 0], sizes = [16, 16, 128], strides = [1, 1, 1]} : vector<18x24x128xf32> to vector<16x16x128xf32>
    %29 = vector.shape_cast %28 : vector<16x16x128xf32> to vector<256x128xf32>
    %c0_22 = arith.constant 0 : index
    %c0_23 = arith.constant 0 : index
    %30 = vector.load %arg5[%c0_22, %c0_23] : memref<256x128xf32, #tpu.memory_space<vmem>>, vector<256x128xf32>
    %c0_24 = arith.constant 0 : index
    %c0_25 = arith.constant 0 : index
    %31 = vector.load %arg3[%c0_24, %c0_25] : memref<1x128xf32, #tpu.memory_space<vmem>>, vector<1x128xf32>
    %32 = vector.broadcast %31 : vector<1x128xf32> to vector<256x128xf32>
    %33 = arith.addf %30, %32 : vector<256x128xf32>
    %34 = arith.addf %33, %29 : vector<256x128xf32>
    %cst_26 = arith.constant 0.000000e+00 : f32
    %35 = vector.broadcast %cst_26 : f32 to vector<256x128xf32>
    %36 = arith.maximumf %34, %35 : vector<256x128xf32>
    %c0_27 = arith.constant 0 : index
    %c0_28 = arith.constant 0 : index
    %c0_29 = arith.constant 0 : index
    %37 = vector.load %arg4[%c0_27, %c0_28, %c0_29] : memref<1x256x128xf32, #tpu.memory_space<vmem>>, vector<1x256x128xf32>
    %38 = vector.shape_cast %37 : vector<1x256x128xf32> to vector<256x128xf32>
    %39 = vector.shape_cast %36 : vector<256x128xf32> to vector<1x256x128xf32>
    tpu.vector_store %arg4[%c0_27, %c0_28, %c0_29], %39 {strides = array<i32>} : memref<1x256x128xf32, #tpu.memory_space<vmem>>, vector<1x256x128xf32>,
    return
  }
  func.func @transform_0(%arg0: i32) -> (i32, i32, i32, i32) {
    %c0_i32 = arith.constant 0 : i32
    %c0_i32_0 = arith.constant 0 : i32
    %c0_i32_1 = arith.constant 0 : i32
    %c0_i32_2 = arith.constant 0 : i32
    return %arg0, %c0_i32, %c0_i32_0, %c0_i32_1 : i32, i32, i32, i32
  }
  func.func @transform_1(%arg0: i32) -> (i32, i32, i32) {
    %c0_i32 = arith.constant 0 : i32
    %c0_i32_0 = arith.constant 0 : i32
    %c0_i32_1 = arith.constant 0 : i32
    %c0_i32_2 = arith.constant 0 : i32
    return %c0_i32, %c0_i32_0, %c0_i32_1 : i32, i32, i32
  }
  func.func @transform_2(%arg0: i32) -> (i32, i32) {
    %c0_i32 = arith.constant 0 : i32
    %c0_i32_0 = arith.constant 0 : i32
    %c0_i32_1 = arith.constant 0 : i32
    return %c0_i32, %c0_i32_0 : i32, i32
  }
  func.func @transform_3(%arg0: i32) -> (i32, i32, i32) {
    %c0_i32 = arith.constant 0 : i32
    %c0_i32_0 = arith.constant 0 : i32
    %c0_i32_1 = arith.constant 0 : i32
    return %arg0, %c0_i32, %c0_i32_0 : i32, i32, i32
  }
}

</mosaic_0001>

<llo_original>
// kernel: tpu_custom_call.1
$region0: #{tpu_custom_call.1}
  #allocation0 [shape = 'u32[]', space=smem, size = 0x4, offset = 0x4, fixed_abs, tag = 'smem constant byte address 0x4 - core index']
  #allocation1 [shape = 'u32[144,128]{1,0:T(1,128)}', space=vmem, size = 0x12000, scoped, tag = 'internal scratch']
  #allocation2 [shape = 'f32[256,128]{1,0:T(8,128)}', space=vmem, size = 0x20000, scoped, tag = 'scratch operand']
  %s0 = inlined_call_operand.hbm [shape: f32[2,18,24,128], index: 0, kind: input, shape index: {}]
  %s1 = inlined_call_operand.hbm [shape: f32[3,384,128], index: 1, kind: input, shape index: {}]
  %s2 = inlined_call_operand.vmem [shape: f32[1,128], index: 2, kind: input, shape index: {}]
  %s3 = inlined_call_operand.hbm [shape: f32[2,256,128], index: 3, kind: output, shape index: {}]
  %s4 = sld [smem:[#allocation0]]
  $region53: #{tpu_custom_call.1} parent=0
    _
  %s6 = ssub.s32 1, %s4
  %s7 = scalar_select 0, %s6, %s4
  $region1: #{tpu_custom_call.1} parent=0
    #allocation3 [shape = 'u8[442368]{0}', space=vmem, size = 0x6c000, scoped, tag = 'input window, operand 0']
    #allocation4 [shape = 's32[2]{0}', space=sflag, size = 0x8, scoped, tag = 'scoped memory for tpu_custom_call.1']
    #allocation5 [shape = 's32[2]{0}', space=sflag, size = 0x8, scoped, tag = 'scoped memory for tpu_custom_call.1']
    #allocation6 [shape = 'u8[589824]{0}', space=vmem, size = 0x90000, scoped, tag = 'input window, operand 1, single buffered']
    #allocation7 [shape = 's32[1]{0}', space=sflag, size = 0x4, scoped, tag = 'scoped memory for tpu_custom_call.1']
    #allocation8 [shape = 'u8[262144]{0}', space=vmem, size = 0x40000, scoped, tag = 'output window, operand 0']
    %8 = vsyncpa [#allocation4], 0
    %s9 = scalar_lea.sflag [#allocation4], 1
    %10 = vsyncpa %s9, 0
    %11 = vsyncpa [#allocation7], 0
    %12 = vsyncpa [#allocation5], 0
    %s13 = scalar_lea.sflag [#allocation5], 1
    %14 = vsyncpa %s13, 0
    loop: start=0, step=1, limit=4
    $region2: #{tpu_custom_call.1} parent=1 // loop_pre_header
      _
    $region3: #{tpu_custom_call.1} parent=1 // loop_header
      %s16 = sphi 0, %s20
      %p17 = scmp.ge.s32.totalorder %s16, 4
      %s26 = sphi 0, %s28
      %s29 = sphi 0, %s26
      %s30 = sphi 0, %s29
      %s46 = sphi 0, %s30
      %s50 = sphi 0, %s50
      %s52 = sphi 0, %s50
      %s53 = sphi 0, %s52
      %s67 = sphi 0, %s53
      %s71 = sphi 0, %s71
      %s73 = sphi 0, %s71
      %s74 = sphi 0, %s73
      %s88 = sphi 0, %s74
      %s94 = sphi 0, %s96
      %s97 = sphi 0, %s94
      %s98 = sphi 0, %s97
      %s114 = sphi 0, %s98
    $region4: #{tpu_custom_call.1} parent=1 // loop_header_branch
      %19 = sbr.rel (%p17) target = $region8
    $region5: #{tpu_custom_call.1} parent=1 // loop_body
      %s21 = ssub.s32 %s16, 1
      %s22 = ssub.s32 %s16, 2
      %s23 = sadd.s32 %s16, 1
      %s24 = ssub.s32 %s16, %s23
      %p25 = scmp.eq.s32.totalorder %s24, 0
      %s27 = sadd.s32 %s26, 1
      %s28 = scalar_select %p25, %s26, %s27
      %p31 = pneg %p25
      %p32 = scmp.eq.s32.totalorder %s16, 1
      %p33 = por %p31, %p32
      %p34 = scmp.ne.s32.totalorder %s26, %s29
      %p35 = scmp.eq.s32.totalorder %s16, 0
      %p36 = por %p34, %p35
      %p37 = scmp.ne.s32.totalorder %s26, %s29
      %p38 = scmp.eq.s32.totalorder %s21, 1
      %p39 = por %p37, %p38
      %p40 = scmp.ne.s32.totalorder %s29, %s30
      %p41 = scmp.eq.s32.totalorder %s21, 0
      %p42 = por %p40, %p41
      %p43 = scmp.ne.s32.totalorder %s29, %s30
      %p44 = scmp.eq.s32.totalorder %s22, 1
      %p45 = por %p43, %p44
      %p47 = scmp.ne.s32.totalorder %s30, %s46
      %p48 = scmp.eq.s32.totalorder %s22, 0
      %p49 = por %p47, %p48
      %s51 = sadd.s32 %s50, 1
      %p54 = scmp.eq.s32.totalorder %s16, 1
      %p55 = scmp.ne.s32.totalorder %s50, %s52
      %p56 = scmp.eq.s32.totalorder %s16, 0
      %p57 = por %p55, %p56
      %p58 = scmp.ne.s32.totalorder %s50, %s52
      %p59 = scmp.eq.s32.totalorder %s21, 1
      %p60 = por %p58, %p59
      %p61 = scmp.ne.s32.totalorder %s52, %s53
      %p62 = scmp.eq.s32.totalorder %s21, 0
      %p63 = por %p61, %p62
      %p64 = scmp.ne.s32.totalorder %s52, %s53
      %p65 = scmp.eq.s32.totalorder %s22, 1
      %p66 = por %p64, %p65
      %p68 = scmp.ne.s32.totalorder %s53, %s67
      %p69 = scmp.eq.s32.totalorder %s22, 0
      %p70 = por %p68, %p69
      %s72 = sadd.s32 %s71, 1
      %p75 = scmp.eq.s32.totalorder %s16, 1
      %p76 = scmp.ne.s32.totalorder %s71, %s73
      %p77 = scmp.eq.s32.totalorder %s16, 0
      %p78 = por %p76, %p77
      %p79 = scmp.ne.s32.totalorder %s71, %s73
      %p80 = scmp.eq.s32.totalorder %s21, 1
      %p81 = por %p79, %p80
      %p82 = scmp.ne.s32.totalorder %s73, %s74
      %p83 = scmp.eq.s32.totalorder %s21, 0
      %p84 = por %p82, %p83
      %p85 = scmp.ne.s32.totalorder %s73, %s74
      %p86 = scmp.eq.s32.totalorder %s22, 1
      %p87 = por %p85, %p86
      %p89 = scmp.ne.s32.totalorder %s74, %s88
      %p90 = scmp.eq.s32.totalorder %s22, 0
      %p91 = por %p89, %p90
      %s92 = ssub.s32 %s16, %s23
      %p93 = scmp.eq.s32.totalorder %s92, 0
      %s95 = sadd.s32 %s94, 1
      %s96 = scalar_select %p93, %s94, %s95
      %p99 = pneg %p93
      %p100 = scmp.eq.s32.totalorder %s16, 1
      %p101 = por %p99, %p100
      %p102 = scmp.ne.s32.totalorder %s94, %s97
      %p103 = scmp.eq.s32.totalorder %s16, 0
      %p104 = por %p102, %p103
      %p105 = scmp.ne.s32.totalorder %s94, %s97
      %p106 = scmp.eq.s32.totalorder %s21, 1
      %p107 = por %p105, %p106
      %p108 = scmp.ne.s32.totalorder %s97, %s98
      %p109 = scmp.eq.s32.totalorder %s21, 0
      %p110 = por %p108, %p109
      %p111 = scmp.ne.s32.totalorder %s97, %s98
      %p112 = scmp.eq.s32.totalorder %s22, 1
      %p113 = por %p111, %p112
      %p115 = scmp.ne.s32.totalorder %s98, %s114
      %p116 = scmp.eq.s32.totalorder %s22, 0
      %p117 = por %p115, %p116
      %p118 = scmp.le.s32.totalorder 1, %s16
      %p119 = scmp.lt.s32.totalorder %s16, 3
      %p120 = pnand %p118, %p119
      %p121 = pneg %p120
      // Predicated region
      $region9: #{tpu_custom_call.1} parent=5 // pred_check
        _
      $region10: #{tpu_custom_call.1} parent=5 // pred_check_branch
        %123 = sbr.rel (%p120) target = $region12
      $region11: #{tpu_custom_call.1} parent=5 // pred_region
        %s124 = ssub.s32 %s16, 1
        // Predicated region
        $region13: #{tpu_custom_call.1} parent=11 // pred_check
          %p125 = pneg %p63
        $region14: #{tpu_custom_call.1} parent=11 // pred_check_branch
          %127 = sbr.rel (%p125) target = $region16
        $region15: #{tpu_custom_call.1} parent=11 // pred_region
          %s129 = ssub.s32 18432, 18432
          %130 = vsyncadd [#allocation7], %s129
          %s131 = sshll.u32 [#allocation6], 4
          %s132 = int_to_ptr.vmem [resolvable:$true] %s131
          %137 = dma.hbm_to_vmem [thread:$0]  %s1, 18432, %s132, [#allocation7], 128, 128, 8
        $region16: #{tpu_custom_call.1} parent=11 // pred_fallthru
          _
        // Predicated region
        $region17: #{tpu_custom_call.1} parent=11 // pred_check
          %p138 = pneg %p84
        $region18: #{tpu_custom_call.1} parent=11 // pred_check_branch
          %140 = sbr.rel (%p138) target = $region20
        $region19: #{tpu_custom_call.1} parent=11 // pred_region
          _
        $region20: #{tpu_custom_call.1} parent=11 // pred_fallthru
          _
      $region12: #{tpu_custom_call.1} parent=5 // pred_fallthru
        _
      %p141 = scmp.lt.s32.totalorder %s16, 2
      // Predicated region
      $region21: #{tpu_custom_call.1} parent=5 // pred_check
        %p142 = pneg %p141
      $region22: #{tpu_custom_call.1} parent=5 // pred_check_branch
        %144 = sbr.rel (%p142) target = $region24
      $region23: #{tpu_custom_call.1} parent=5 // pred_region
        // Predicated region
        $region25: #{tpu_custom_call.1} parent=23 // pred_check
          %p145 = pneg %p36
        $region26: #{tpu_custom_call.1} parent=23 // pred_check_branch
          %147 = sbr.rel (%p145) target = $region28
        $region27: #{tpu_custom_call.1} parent=23 // pred_region
          %s148 = sand.u32 %s26, 1
          %s149 = scalar_lea.sflag [#allocation4], %s148
          %s150 = sand.u32 %s26, 1
          %s151 = smul.addr %s150, 432
          %s152 = scalar_lea.vmem [#allocation3], %s151
          %s154 = ssub.s32 6912, 6912
          %155 = vsyncadd %s149, %s154
          %s156 = smul.addr %s16, 54
          %s157 = smul.addr %s156, 128
          %s158 = scalar_lea.hbm %s0, %s157
          %s159 = sshll.u32 %s152, 4
          %s160 = int_to_ptr.vmem [resolvable:$true] %s159
          %165 = dma.hbm_to_vmem [thread:$0]  %s158, 6912, %s160, %s149, 128, 128, 8
        $region28: #{tpu_custom_call.1} parent=23 // pred_fallthru
          _
      $region24: #{tpu_custom_call.1} parent=5 // pred_fallthru
        _
      %p166 = scmp.le.s32.totalorder 1, %s16
      %p167 = scmp.lt.s32.totalorder %s16, 3
      %p168 = pnand %p166, %p167
      %p169 = pneg %p168
      // Predicated region
      $region29: #{tpu_custom_call.1} parent=5 // pred_check
        _
      $region30: #{tpu_custom_call.1} parent=5 // pred_check_branch
        %171 = sbr.rel (%p168) target = $region32
      $region31: #{tpu_custom_call.1} parent=5 // pred_region
        %s172 = ssub.s32 %s16, 1
        %s173 = sand.u32 %s29, 1
        %s174 = scalar_lea.sflag [#allocation4], %s173
        %s175 = sand.u32 %s29, 1
        %s176 = smul.addr %s175, 432
        %s177 = scalar_lea.vmem [#allocation3], %s176
        // Predicated region
        $region33: #{tpu_custom_call.1} parent=31 // pred_check
          %p178 = pneg %p42
        $region34: #{tpu_custom_call.1} parent=31 // pred_check_branch
          %180 = sbr.rel (%p178) target = $region36
        $region35: #{tpu_custom_call.1} parent=31 // pred_region
          %181 = dma.done %s174, 6912
        $region36: #{tpu_custom_call.1} parent=31 // pred_fallthru
          _
        // Predicated region
        $region37: #{tpu_custom_call.1} parent=31 // pred_check
          %p182 = pneg %p63
        $region38: #{tpu_custom_call.1} parent=31 // pred_check_branch
          %184 = sbr.rel (%p182) target = $region40
        $region39: #{tpu_custom_call.1} parent=31 // pred_region
          %185 = dma.done [#allocation7], 18432
        $region40: #{tpu_custom_call.1} parent=31 // pred_fallthru
          _
        %s186 = sand.u32 %s29, 1
        %s187 = scalar_lea.sflag [#allocation4], %s186
        %s188 = sand.u32 %s29, 1
        %s189 = smul.addr %s188, 432
        %s190 = scalar_lea.vmem [#allocation3], %s189
        %p191 = pneg %p42
        %p192 = pneg %p39
        %p193 = pneg %p63
        %p194 = pneg %p60
        %p195 = pneg %p84
        %p196 = pneg %p81
        %p197 = pneg %p110
        %p198 = pneg %p107
        %s199 = sand.u32 %s97, 1
        %s200 = scalar_lea.sflag [#allocation5], %s199
        %s201 = sand.u32 %s97, 1
        %s202 = smul.addr %s201, 256
        %s203 = scalar_lea.vmem [#allocation8], %s202
        %v204 = vld [vmem:[%s177] sm:$0xff]
        %v205 = vld [vmem:[%s177 + $0x8] sm:$0xff]
        %v206 = vld [vmem:[%s177 + $0x10] sm:$0xff]
        %v207 = vld [vmem:[%s177 + $0x18] sm:$0xff]
        %v208 = vld [vmem:[%s177 + $0x20] sm:$0xff]
        %v209 = vld [vmem:[%s177 + $0x28] sm:$0xff]
        %v210 = vld [vmem:[%s177 + $0x30] sm:$0xff]
        %v211 = vld [vmem:[%s177 + $0x38] sm:$0xff]
        %v212 = vld [vmem:[%s177 + $0x40] sm:$0xff]
        %v213 = vld [vmem:[%s177 + $0x48] sm:$0xff]
        %v214 = vld [vmem:[%s177 + $0x50] sm:$0xff]
        %v215 = vld [vmem:[%s177 + $0x58] sm:$0xff]
        %v216 = vld [vmem:[%s177 + $0x60] sm:$0xff]
        %v217 = vld [vmem:[%s177 + $0x68] sm:$0xff]
        %v218 = vld [vmem:[%s177 + $0x70] sm:$0xff]
        %v219 = vld [vmem:[%s177 + $0x78] sm:$0xff]
        %v220 = vld [vmem:[%s177 + $0x80] sm:$0xff]
        %v221 = vld [vmem:[%s177 + $0x88] sm:$0xff]
        %v222 = vld [vmem:[%s177 + $0x90] sm:$0xff]
        %v223 = vld [vmem:[%s177 + $0x98] sm:$0xff]
        %v224 = vld [vmem:[%s177 + $0xa0] sm:$0xff]
        %v225 = vld [vmem:[%s177 + $0xa8] sm:$0xff]
        %v226 = vld [vmem:[%s177 + $0xb0] sm:$0xff]
        %v227 = vld [vmem:[%s177 + $0xb8] sm:$0xff]
        %v228 = vld [vmem:[%s177 + $0xc0] sm:$0xff]
        %v229 = vld [vmem:[%s177 + $0xc8] sm:$0xff]
        %v230 = vld [vmem:[%s177 + $0xd0] sm:$0xff]
        %v231 = vld [vmem:[%s177 + $0xd8] sm:$0xff]
        %v232 = vld [vmem:[%s177 + $0xe0] sm:$0xff]
        %v233 = vld [vmem:[%s177 + $0xe8] sm:$0xff]
        %v234 = vld [vmem:[%s177 + $0xf0] sm:$0xff]
        %v235 = vld [vmem:[%s177 + $0xf8] sm:$0xff]
        %v236 = vld [vmem:[%s177 + $0x100] sm:$0xff]
        %v237 = vld [vmem:[%s177 + $0x108] sm:$0xff]
        %v238 = vld [vmem:[%s177 + $0x110] sm:$0xff]
        %v239 = vld [vmem:[%s177 + $0x118] sm:$0xff]
        %v240 = vld [vmem:[%s177 + $0x120] sm:$0xff]
        %v241 = vld [vmem:[%s177 + $0x128] sm:$0xff]
        %v242 = vld [vmem:[%s177 + $0x130] sm:$0xff]
        %v243 = vld [vmem:[%s177 + $0x138] sm:$0xff]
        %v244 = vld [vmem:[%s177 + $0x140] sm:$0xff]
        %v245 = vld [vmem:[%s177 + $0x148] sm:$0xff]
        %v246 = vld [vmem:[%s177 + $0x150] sm:$0xff]
        %v247 = vld [vmem:[%s177 + $0x158] sm:$0xff]
        %v248 = vld [vmem:[%s177 + $0x160] sm:$0xff]
        %v249 = vld [vmem:[%s177 + $0x168] sm:$0xff]
        %v250 = vld [vmem:[%s177 + $0x170] sm:$0xff]
        %v251 = vld [vmem:[%s177 + $0x178] sm:$0xff]
        %v252 = vld [vmem:[%s177 + $0x180] sm:$0xff]
        %v253 = vld [vmem:[%s177 + $0x188] sm:$0xff]
        %v254 = vld [vmem:[%s177 + $0x190] sm:$0xff]
        %v255 = vld [vmem:[%s177 + $0x198] sm:$0xff]
        %v256 = vld [vmem:[%s177 + $0x1a0] sm:$0xff]
        %v257 = vld [vmem:[%s177 + $0x1a8] sm:$0xff]
        %vm312 = vcmask 1046528
        %v313 = vrot.slane %v204, 1
        %v314 = vrot.slane %v205, 1
        %v315 = vsel %vm312, %v313, %v314
        %v316 = vrot.slane %v206, 1
        %v317 = vsel %vm312, %v314, %v316
        %v318 = vrot.slane %v207, 1
        %v319 = vrot.slane %v208, 1
        %v320 = vsel %vm312, %v318, %v319
        %v321 = vrot.slane %v209, 1
        %v322 = vsel %vm312, %v319, %v321
        %v323 = vrot.slane %v210, 1
        %v324 = vrot.slane %v211, 1
        %v325 = vsel %vm312, %v323, %v324
        %v326 = vrot.slane %v212, 1
        %v327 = vsel %vm312, %v324, %v326
        %v328 = vrot.slane %v213, 1
        %v329 = vrot.slane %v214, 1
        %v330 = vsel %vm312, %v328, %v329
        %v331 = vrot.slane %v215, 1
        %v332 = vsel %vm312, %v329, %v331
        %v333 = vrot.slane %v216, 1
        %v334 = vrot.slane %v217, 1
        %v335 = vsel %vm312, %v333, %v334
        %v336 = vrot.slane %v218, 1
        %v337 = vsel %vm312, %v334, %v336
        %v338 = vrot.slane %v219, 1
        %v339 = vrot.slane %v220, 1
        %v340 = vsel %vm312, %v338, %v339
        %v341 = vrot.slane %v221, 1
        %v342 = vsel %vm312, %v339, %v341
        %v343 = vrot.slane %v222, 1
        %v344 = vrot.slane %v223, 1
        %v345 = vsel %vm312, %v343, %v344
        %v346 = vrot.slane %v224, 1
        %v347 = vsel %vm312, %v344, %v346
        %v348 = vrot.slane %v225, 1
        %v349 = vrot.slane %v226, 1
        %v350 = vsel %vm312, %v348, %v349
        %v351 = vrot.slane %v227, 1
        %v352 = vsel %vm312, %v349, %v351
        %v353 = vrot.slane %v228, 1
        %v354 = vrot.slane %v229, 1
        %v355 = vsel %vm312, %v353, %v354
        %v356 = vrot.slane %v230, 1
        %v357 = vsel %vm312, %v354, %v356
        %v358 = vrot.slane %v231, 1
        %v359 = vrot.slane %v232, 1
        %v360 = vsel %vm312, %v358, %v359
        %v361 = vrot.slane %v233, 1
        %v362 = vsel %vm312, %v359, %v361
        %v363 = vrot.slane %v234, 1
        %v364 = vrot.slane %v235, 1
        %v365 = vsel %vm312, %v363, %v364
        %v366 = vrot.slane %v236, 1
        %v367 = vsel %vm312, %v364, %v366
        %v368 = vrot.slane %v237, 1
        %v369 = vrot.slane %v238, 1
        %v370 = vsel %vm312, %v368, %v369
        %v371 = vrot.slane %v239, 1
        %v372 = vsel %vm312, %v369, %v371
        %v373 = vrot.slane %v240, 1
        %v374 = vrot.slane %v241, 1
        %v375 = vsel %vm312, %v373, %v374
        %v376 = vrot.slane %v242, 1
        %v377 = vsel %vm312, %v374, %v376
        %v378 = vrot.slane %v243, 1
        %v379 = vrot.slane %v244, 1
        %v380 = vsel %vm312, %v378, %v379
        %v381 = vrot.slane %v245, 1
        %v382 = vsel %vm312, %v379, %v381
        %v383 = vrot.slane %v246, 1
        %v384 = vrot.slane %v247, 1
        %v385 = vsel %vm312, %v383, %v384
        %v386 = vrot.slane %v248, 1
        %v387 = vsel %vm312, %v384, %v386
        %v388 = vrot.slane %v249, 1
        %v389 = vrot.slane %v250, 1
        %v390 = vsel %vm312, %v388, %v389
        %v391 = vrot.slane %v251, 1
        %v392 = vsel %vm312, %v389, %v391
        %v393 = vrot.slane %v252, 1
        %v394 = vrot.slane %v253, 1
        %v395 = vsel %vm312, %v393, %v394
        %v396 = vrot.slane %v254, 1
        %v397 = vsel %vm312, %v394, %v396
        %v398 = vrot.slane %v255, 1
        %v399 = vrot.slane %v256, 1
        %v400 = vsel %vm312, %v398, %v399
        %v401 = vrot.slane %v257, 1
        %v402 = vsel %vm312, %v399, %v401
        %vm439 = vcmask 1045504
        %v440 = vrot.slane %v204, 2
        %v441 = vrot.slane %v205, 2
        %v442 = vsel %vm439, %v440, %v441
        %v443 = vrot.slane %v206, 2
        %v444 = vsel %vm439, %v441, %v443
        %v445 = vrot.slane %v207, 2
        %v446 = vrot.slane %v208, 2
        %v447 = vsel %vm439, %v445, %v446
        %v448 = vrot.slane %v209, 2
        %v449 = vsel %vm439, %v446, %v448
        %v450 = vrot.slane %v210, 2
        %v451 = vrot.slane %v211, 2
        %v452 = vsel %vm439, %v450, %v451
        %v453 = vrot.slane %v212, 2
        %v454 = vsel %vm439, %v451, %v453
        %v455 = vrot.slane %v213, 2
        %v456 = vrot.slane %v214, 2
        %v457 = vsel %vm439, %v455, %v456
        %v458 = vrot.slane %v215, 2
        %v459 = vsel %vm439, %v456, %v458
        %v460 = vrot.slane %v216, 2
        %v461 = vrot.slane %v217, 2
        %v462 = vsel %vm439, %v460, %v461
        %v463 = vrot.slane %v218, 2
        %v464 = vsel %vm439, %v461, %v463
        %v465 = vrot.slane %v219, 2
        %v466 = vrot.slane %v220, 2
        %v467 = vsel %vm439, %v465, %v466
        %v468 = vrot.slane %v221, 2
        %v469 = vsel %vm439, %v466, %v468
        %v470 = vrot.slane %v222, 2
        %v471 = vrot.slane %v223, 2
        %v472 = vsel %vm439, %v470, %v471
        %v473 = vrot.slane %v224, 2
        %v474 = vsel %vm439, %v471, %v473
        %v475 = vrot.slane %v225, 2
        %v476 = vrot.slane %v226, 2
        %v477 = vsel %vm439, %v475, %v476
        %v478 = vrot.slane %v227, 2
        %v479 = vsel %vm439, %v476, %v478
        %v480 = vrot.slane %v228, 2
        %v481 = vrot.slane %v229, 2
        %v482 = vsel %vm439, %v480, %v481
        %v483 = vrot.slane %v230, 2
        %v484 = vsel %vm439, %v481, %v483
        %v485 = vrot.slane %v231, 2
        %v486 = vrot.slane %v232, 2
        %v487 = vsel %vm439, %v485, %v486
        %v488 = vrot.slane %v233, 2
        %v489 = vsel %vm439, %v486, %v488
        %v490 = vrot.slane %v234, 2
        %v491 = vrot.slane %v235, 2
        %v492 = vsel %vm439, %v490, %v491
        %v493 = vrot.slane %v236, 2
        %v494 = vsel %vm439, %v491, %v493
        %v495 = vrot.slane %v237, 2
        %v496 = vrot.slane %v238, 2
        %v497 = vsel %vm439, %v495, %v496
        %v498 = vrot.slane %v239, 2
        %v499 = vsel %vm439, %v496, %v498
        %v500 = vrot.slane %v240, 2
        %v501 = vrot.slane %v241, 2
        %v502 = vsel %vm439, %v500, %v501
        %v503 = vrot.slane %v242, 2
        %v504 = vsel %vm439, %v501, %v503
        %v505 = vrot.slane %v243, 2
        %v506 = vrot.slane %v244, 2
        %v507 = vsel %vm439, %v505, %v506
        %v508 = vrot.slane %v245, 2
        %v509 = vsel %vm439, %v506, %v508
        %v510 = vrot.slane %v246, 2
        %v511 = vrot.slane %v247, 2
        %v512 = vsel %vm439, %v510, %v511
        %v513 = vrot.slane %v248, 2
        %v514 = vsel %vm439, %v511, %v513
        %v515 = vrot.slane %v249, 2
        %v516 = vrot.slane %v250, 2
        %v517 = vsel %vm439, %v515, %v516
        %v518 = vrot.slane %v251, 2
        %v519 = vsel %vm439, %v516, %v518
        %v520 = vrot.slane %v252, 2
        %v521 = vrot.slane %v253, 2
        %v522 = vsel %vm439, %v520, %v521
        %v523 = vrot.slane %v254, 2
        %v524 = vsel %vm439, %v521, %v523
        %v525 = vrot.slane %v255, 2
        %v526 = vrot.slane %v256, 2
        %v527 = vsel %vm439, %v525, %v526
        %v528 = vrot.slane %v257, 2
        %v529 = vsel %vm439, %v526, %v528
        %v566 = vld [vmem:[#allocation6] sm:$0xff]
        %v567 = vld [vmem:[#allocation6 + $0x8] sm:$0xff]
        %v568 = vld [vmem:[#allocation6 + $0x10] sm:$0xff]
        %v569 = vld [vmem:[#allocation6 + $0x18] sm:$0xff]
        %v570 = vld [vmem:[#allocation6 + $0x20] sm:$0xff]
        %v571 = vld [vmem:[#allocation6 + $0x28] sm:$0xff]
        %v572 = vld [vmem:[#allocation6 + $0x30] sm:$0xff]
        %v573 = vld [vmem:[#allocation6 + $0x38] sm:$0xff]
        %v574 = vld [vmem:[#allocation6 + $0x40] sm:$0xff]
        %v575 = vld [vmem:[#allocation6 + $0x48] sm:$0xff]
        %v576 = vld [vmem:[#allocation6 + $0x50] sm:$0xff]
        %v577 = vld [vmem:[#allocation6 + $0x58] sm:$0xff]
        %v578 = vld [vmem:[#allocation6 + $0x60] sm:$0xff]
        %v579 = vld [vmem:[#allocation6 + $0x68] sm:$0xff]
        %v580 = vld [vmem:[#allocation6 + $0x70] sm:$0xff]
        %v581 = vld [vmem:[#allocation6 + $0x78] sm:$0xff]
        %v582 = vld [vmem:[#allocation6 + $0x80] sm:$0xff]
        %v583 = vld [vmem:[#allocation6 + $0x88] sm:$0xff]
        %v584 = vld [vmem:[#allocation6 + $0x90] sm:$0xff]
        %v585 = vld [vmem:[#allocation6 + $0x98] sm:$0xff]
        %v586 = vld [vmem:[#allocation6 + $0xa0] sm:$0xff]
        %v587 = vld [vmem:[#allocation6 + $0xa8] sm:$0xff]
        %v588 = vld [vmem:[#allocation6 + $0xb0] sm:$0xff]
        %v589 = vld [vmem:[#allocation6 + $0xb8] sm:$0xff]
        %v590 = vld [vmem:[#allocation6 + $0xc0] sm:$0xff]
        %v591 = vld [vmem:[#allocation6 + $0xc8] sm:$0xff]
        %v592 = vld [vmem:[#allocation6 + $0xd0] sm:$0xff]
        %v593 = vld [vmem:[#allocation6 + $0xd8] sm:$0xff]
        %v594 = vld [vmem:[#allocation6 + $0xe0] sm:$0xff]
        %v595 = vld [vmem:[#allocation6 + $0xe8] sm:$0xff]
        %v596 = vld [vmem:[#allocation6 + $0xf0] sm:$0xff]
        %v597 = vld [vmem:[#allocation6 + $0xf8] sm:$0xff]
        %v598 = vld [vmem:[#allocation6 + $0x100] sm:$0xff]
        %v599 = vld [vmem:[#allocation6 + $0x108] sm:$0xff]
        %v600 = vld [vmem:[#allocation6 + $0x110] sm:$0xff]
        %v601 = vld [vmem:[#allocation6 + $0x118] sm:$0xff]
        %v602 = vld [vmem:[#allocation6 + $0x120] sm:$0xff]
        %v603 = vld [vmem:[#allocation6 + $0x128] sm:$0xff]
        %v604 = vld [vmem:[#allocation6 + $0x130] sm:$0xff]
        %v605 = vld [vmem:[#allocation6 + $0x138] sm:$0xff]
        %v606 = vld [vmem:[#allocation6 + $0x140] sm:$0xff]
        %v607 = vld [vmem:[#allocation6 + $0x148] sm:$0xff]
        %v608 = vld [vmem:[#allocation6 + $0x150] sm:$0xff]
        %v609 = vld [vmem:[#allocation6 + $0x158] sm:$0xff]
        %v610 = vld [vmem:[#allocation6 + $0x160] sm:$0xff]
        %v611 = vld [vmem:[#allocation6 + $0x168] sm:$0xff]
        %v612 = vld [vmem:[#allocation6 + $0x170] sm:$0xff]
        %v613 = vld [vmem:[#allocation6 + $0x178] sm:$0xff]
        %614 = vmatprep.subr.mxu0 0.0
        %615 = vmatpush1.msra.mxu0 %v566
        %616 = vmatprep.subr.mxu0 0.0
        %617 = vmatpush1.msra.mxu0 %v567
        %618 = vmatprep.subr.mxu0 0.0
        %619 = vmatpush1.msra.mxu0 %v568
        %620 = vmatprep.subr.mxu0 0.0
        %621 = vmatpush1.msra.mxu0 %v569
        %622 = vmatprep.subr.mxu0 0.0
        %623 = vmatpush1.msra.mxu0 %v570
        %624 = vmatprep.subr.mxu0 0.0
        %625 = vmatpush1.msra.mxu0 %v571
        %626 = vmatprep.subr.mxu0 0.0
        %627 = vmatpush1.msra.mxu0 %v572
        %628 = vmatprep.subr.mxu0 0.0
        %629 = vmatpush1.msra.mxu0 %v573
        %630 = vmatprep.subr.mxu0 0.0
        %631 = vmatpush1.msra.mxu0 %v574
        %632 = vmatprep.subr.mxu0 0.0
        %633 = vmatpush1.msra.mxu0 %v575
        %634 = vmatprep.subr.mxu0 0.0
        %635 = vmatpush1.msra.mxu0 %v576
        %636 = vmatprep.subr.mxu0 0.0
        %637 = vmatpush1.msra.mxu0 %v577
        %638 = vmatprep.subr.mxu0 0.0
        %639 = vmatpush1.msra.mxu0 %v578
        %640 = vmatprep.subr.mxu0 0.0
        %641 = vmatpush1.msra.mxu0 %v579
        %642 = vmatprep.subr.mxu0 0.0
        %643 = vmatpush1.msra.mxu0 %v580
        %644 = vmatprep.subr.mxu0 0.0
        %645 = vmatpush1.msra.mxu0 %v581
        %646 = vmatprep.subr.mxu0 0.0
        %647 = vmatpush1.msra.mxu0 %v582
        %648 = vmatprep.subr.mxu0 0.0
        %649 = vmatpush1.msra.mxu0 %v583
        %650 = vmatprep.subr.mxu0 0.0
        %651 = vmatpush1.msra.mxu0 %v584
        %652 = vmatprep.subr.mxu0 0.0
        %653 = vmatpush1.msra.mxu0 %v585
        %654 = vmatprep.subr.mxu0 0.0
        %655 = vmatpush1.msra.mxu0 %v586
        %656 = vmatprep.subr.mxu0 0.0
        %657 = vmatpush1.msra.mxu0 %v587
        %658 = vmatprep.subr.mxu0 0.0
        %659 = vmatpush1.msra.mxu0 %v588
        %660 = vmatprep.subr.mxu0 0.0
        %661 = vmatpush1.msra.mxu0 %v589
        %662 = vmatprep.subr.mxu0 0.0
        %663 = vmatpush1.msra.mxu0 %v590
        %664 = vmatprep.subr.mxu0 0.0
        %665 = vmatpush1.msra.mxu0 %v591
        %666 = vmatprep.subr.mxu0 0.0
        %667 = vmatpush1.msra.mxu0 %v592
        %668 = vmatprep.subr.mxu0 0.0
        %669 = vmatpush1.msra.mxu0 %v593
        %670 = vmatprep.subr.mxu0 0.0
        %671 = vmatpush1.msra.mxu0 %v594
        %672 = vmatprep.subr.mxu0 0.0
        %673 = vmatpush1.msra.mxu0 %v595
        %674 = vmatprep.subr.mxu0 0.0
        %675 = vmatpush1.msra.mxu0 %v596
        %676 = vmatprep.subr.mxu0 0.0
        %677 = vmatpush1.msra.mxu0 %v597
        %678 = vmatprep.mubr.f32.mxu0 %v315
        %679 = vmatmul.mubr.f32.gmra.mrb[0].mxu0 %v204
        %v680 = vpop.f32.mrb[0].mxu0
        %v681 = vadd.f32 0.0, %v680
        %v682 = vpop.f32.mrb[0].mxu0
        %683 = vmatprep.mubr.f32.mxu0 %v317
        %684 = vmatmul.mubr.f32.gmra.mrb[0].mxu0 %v205
        %v685 = vpop.f32.mrb[0].mxu0
        %v686 = vadd.f32 0.0, %v685
        %v687 = vpop.f32.mrb[0].mxu0
        %688 = vmatprep.mubr.f32.mxu0 %v320
        %689 = vmatmul.mubr.f32.gmra.mrb[0].mxu0 %v207
        %v690 = vpop.f32.mrb[0].mxu0
        %v691 = vadd.f32 0.0, %v690
        %v692 = vpop.f32.mrb[0].mxu0
        %693 = vmatprep.mubr.f32.mxu0 %v322
        %694 = vmatmul.mubr.f32.gmra.mrb[0].mxu0 %v208
        %v695 = vpop.f32.mrb[0].mxu0
        %v696 = vadd.f32 0.0, %v695
        %v697 = vpop.f32.mrb[0].mxu0
        %698 = vmatprep.mubr.f32.mxu0 %v325
        %699 = vmatmul.mubr.f32.gmra.mrb[0].mxu0 %v210
        %v700 = vpop.f32.mrb[0].mxu0
        %v701 = vadd.f32 0.0, %v700
        %v702 = vpop.f32.mrb[0].mxu0
        %703 = vmatprep.mubr.f32.mxu0 %v327
        %704 = vmatmul.mubr.f32.gmra.mrb[0].mxu0 %v211
        %v705 = vpop.f32.mrb[0].mxu0
        %v706 = vadd.f32 0.0, %v705
        %v707 = vpop.f32.mrb[0].mxu0
        %708 = vmatprep.mubr.f32.mxu0 %v330
        %709 = vmatmul.mubr.f32.gmra.mrb[0].mxu0 %v213
        %v710 = vpop.f32.mrb[0].mxu0
        %v711 = vadd.f32 0.0, %v710
        %v712 = vpop.f32.mrb[0].mxu0
        %713 = vmatprep.mubr.f32.mxu0 %v332
        %714 = vmatmul.mubr.f32.gmra.mrb[0].mxu0 %v214
        %v715 = vpop.f32.mrb[0].mxu0
        %v716 = vadd.f32 0.0, %v715
        %v717 = vpop.f32.mrb[0].mxu0
        %718 = vmatprep.mubr.f32.mxu0 %v335
        %719 = vmatmul.mubr.f32.gmra.mrb[0].mxu0 %v216
        %v720 = vpop.f32.mrb[0].mxu0
        %v721 = vadd.f32 0.0, %v720
        %v722 = vpop.f32.mrb[0].mxu0
        %723 = vmatprep.mubr.f32.mxu0 %v337
        %724 = vmatmul.mubr.f32.gmra.mrb[0].mxu0 %v217
        %v725 = vpop.f32.mrb[0].mxu0
        %v726 = vadd.f32 0.0, %v725
        %v727 = vpop.f32.mrb[0].mxu0
        %728 = vmatprep.mubr.f32.mxu0 %v340
        %729 = vmatmul.mubr.f32.gmra.mrb[0].mxu0 %v219
        %v730 = vpop.f32.mrb[0].mxu0
        %v731 = vadd.f32 0.0, %v730
        %v732 = vpop.f32.mrb[0].mxu0
        %733 = vmatprep.mubr.f32.mxu0 %v342
        %734 = vmatmul.mubr.f32.gmra.mrb[0].mxu0 %v220
        %v735 = vpop.f32.mrb[0].mxu0
        %v736 = vadd.f32 0.0, %v735
        %v737 = vpop.f32.mrb[0].mxu0
        %738 = vmatprep.mubr.f32.mxu0 %v345
        %739 = vmatmul.mubr.f32.gmra.mrb[0].mxu0 %v222
        %v740 = vpop.f32.mrb[0].mxu0
        %v741 = vadd.f32 0.0, %v740
        %v742 = vpop.f32.mrb[0].mxu0
        %743 = vmatprep.mubr.f32.mxu0 %v347
        %744 = vmatmul.mubr.f32.gmra.mrb[0].mxu0 %v223
        %v745 = vpop.f32.mrb[0].mxu0
        %v746 = vadd.f32 0.0, %v745
        %v747 = vpop.f32.mrb[0].mxu0
        %748 = vmatprep.mubr.f32.mxu0 %v350
        %749 = vmatmul.mubr.f32.gmra.mrb[0].mxu0 %v225
        %v750 = vpop.f32.mrb[0].mxu0
        %v751 = vadd.f32 0.0, %v750
        %v752 = vpop.f32.mrb[0].mxu0
        %753 = vmatprep.mubr.f32.mxu0 %v352
        %754 = vmatmul.mubr.f32.gmra.mrb[0].mxu0 %v226
        %v755 = vpop.f32.mrb[0].mxu0
        %v756 = vadd.f32 0.0, %v755
        %v757 = vpop.f32.mrb[0].mxu0
        %758 = vmatprep.mubr.f32.mxu0 %v355
        %759 = vmatmul.mubr.f32.gmra.mrb[0].mxu0 %v228
        %v760 = vpop.f32.mrb[0].mxu0
        %v761 = vadd.f32 0.0, %v760
        %v762 = vpop.f32.mrb[0].mxu0
        %763 = vmatprep.mubr.f32.mxu0 %v357
        %764 = vmatmul.mubr.f32.gmra.mrb[0].mxu0 %v229
        %v765 = vpop.f32.mrb[0].mxu0
        %v766 = vadd.f32 0.0, %v765
        %v767 = vpop.f32.mrb[0].mxu0
        %768 = vmatprep.mubr.f32.mxu0 %v360
        %769 = vmatmul.mubr.f32.gmra.mrb[0].mxu0 %v231
        %v770 = vpop.f32.mrb[0].mxu0
        %v771 = vadd.f32 0.0, %v770
        %v772 = vpop.f32.mrb[0].mxu0
        %773 = vmatprep.mubr.f32.mxu0 %v362
        %774 = vmatmul.mubr.f32.gmra.mrb[0].mxu0 %v232
        %v775 = vpop.f32.mrb[0].mxu0
        %v776 = vadd.f32 0.0, %v775
        %v777 = vpop.f32.mrb[0].mxu0
        %778 = vmatprep.mubr.f32.mxu0 %v365
        %779 = vmatmul.mubr.f32.gmra.mrb[0].mxu0 %v234
        %v780 = vpop.f32.mrb[0].mxu0
        %v781 = vadd.f32 0.0, %v780
        %v782 = vpop.f32.mrb[0].mxu0
        %783 = vmatprep.mubr.f32.mxu0 %v367
        %784 = vmatmul.mubr.f32.gmra.mrb[0].mxu0 %v235
        %v785 = vpop.f32.mrb[0].mxu0
        %v786 = vadd.f32 0.0, %v785
        %v787 = vpop.f32.mrb[0].mxu0
        %788 = vmatprep.mubr.f32.mxu0 %v370
        %789 = vmatmul.mubr.f32.gmra.mrb[0].mxu0 %v237
        %v790 = vpop.f32.mrb[0].mxu0
        %v791 = vadd.f32 0.0, %v790
        %v792 = vpop.f32.mrb[0].mxu0
        %793 = vmatprep.mubr.f32.mxu0 %v372
        %794 = vmatmul.mubr.f32.gmra.mrb[0].mxu0 %v238
        %v795 = vpop.f32.mrb[0].mxu0
        %v796 = vadd.f32 0.0, %v795
        %v797 = vpop.f32.mrb[0].mxu0
        %798 = vmatprep.mubr.f32.mxu0 %v375
        %799 = vmatmul.mubr.f32.gmra.mrb[0].mxu0 %v240
        %v800 = vpop.f32.mrb[0].mxu0
        %v801 = vadd.f32 0.0, %v800
        %v802 = vpop.f32.mrb[0].mxu0
        %803 = vmatprep.mubr.f32.mxu0 %v377
        %804 = vmatmul.mubr.f32.gmra.mrb[0].mxu0 %v241
        %v805 = vpop.f32.mrb[0].mxu0
        %v806 = vadd.f32 0.0, %v805
        %v807 = vpop.f32.mrb[0].mxu0
        %808 = vmatprep.mubr.f32.mxu0 %v380
        %809 = vmatmul.mubr.f32.gmra.mrb[0].mxu0 %v243
        %v810 = vpop.f32.mrb[0].mxu0
        %v811 = vadd.f32 0.0, %v810
        %v812 = vpop.f32.mrb[0].mxu0
        %813 = vmatprep.mubr.f32.mxu0 %v382
        %814 = vmatmul.mubr.f32.gmra.mrb[0].mxu0 %v244
        %v815 = vpop.f32.mrb[0].mxu0
        %v816 = vadd.f32 0.0, %v815
        %v817 = vpop.f32.mrb[0].mxu0
        %818 = vmatprep.mubr.f32.mxu0 %v385
        %819 = vmatmul.mubr.f32.gmra.mrb[0].mxu0 %v246
        %v820 = vpop.f32.mrb[0].mxu0
        %v821 = vadd.f32 0.0, %v820
        %v822 = vpop.f32.mrb[0].mxu0
        %823 = vmatprep.mubr.f32.mxu0 %v387
        %824 = vmatmul.mubr.f32.gmra.mrb[0].mxu0 %v247
        %v825 = vpop.f32.mrb[0].mxu0
        %v826 = vadd.f32 0.0, %v825
        %v827 = vpop.f32.mrb[0].mxu0
        %828 = vmatprep.mubr.f32.mxu0 %v390
        %829 = vmatmul.mubr.f32.gmra.mrb[0].mxu0 %v249
        %v830 = vpop.f32.mrb[0].mxu0
        %v831 = vadd.f32 0.0, %v830
        %v832 = vpop.f32.mrb[0].mxu0
        %833 = vmatprep.mubr.f32.mxu0 %v392
        %834 = vmatmul.mubr.f32.gmra.mrb[0].mxu0 %v250
        %v835 = vpop.f32.mrb[0].mxu0
        %v836 = vadd.f32 0.0, %v835
        %v837 = vpop.f32.mrb[0].mxu0
        %838 = vdwg.mxu0
        %839 = vmatprep.subr.mxu0 0.0
        %840 = vmatpush1.msra.mxu0 %v598
        %841 = vmatprep.subr.mxu0 0.0
        %842 = vmatpush1.msra.mxu0 %v599
        %843 = vmatprep.subr.mxu0 0.0
        %844 = vmatpush1.msra.mxu0 %v600
        %845 = vmatprep.subr.mxu0 0.0
        %846 = vmatpush1.msra.mxu0 %v601
        %847 = vmatprep.subr.mxu0 0.0
        %848 = vmatpush1.msra.mxu0 %v602
        %849 = vmatprep.subr.mxu0 0.0
        %850 = vmatpush1.msra.mxu0 %v603
        %851 = vmatprep.subr.mxu0 0.0
        %852 = vmatpush1.msra.mxu0 %v604
        %853 = vmatprep.subr.mxu0 0.0
        %854 = vmatpush1.msra.mxu0 %v605
        %855 = vmatprep.subr.mxu0 0.0
        %856 = vmatpush1.msra.mxu0 %v606
        %857 = vmatprep.subr.mxu0 0.0
        %858 = vmatpush1.msra.mxu0 %v607
        %859 = vmatprep.subr.mxu0 0.0
        %860 = vmatpush1.msra.mxu0 %v608
        %861 = vmatprep.subr.mxu0 0.0
        %862 = vmatpush1.msra.mxu0 %v609
        %863 = vmatprep.subr.mxu0 0.0
        %864 = vmatpush1.msra.mxu0 %v610
        %865 = vmatprep.subr.mxu0 0.0
        %866 = vmatpush1.msra.mxu0 %v611
        %867 = vmatprep.subr.mxu0 0.0
        %868 = vmatpush1.msra.mxu0 %v612
        %869 = vmatprep.subr.mxu0 0.0
        %870 = vmatpush1.msra.mxu0 %v613
        %871 = vmatprep.subr.mxu0 0.0
        %872 = vmatpush1.msra.mxu0 0.0
        %873 = vmatprep.subr.mxu0 0.0
        %874 = vmatpush1.msra.mxu0 0.0
        %875 = vmatprep.subr.mxu0 0.0
        %876 = vmatpush1.msra.mxu0 0.0
        %877 = vmatprep.subr.mxu0 0.0
        %878 = vmatpush1.msra.mxu0 0.0
        %879 = vmatprep.subr.mxu0 0.0
        %880 = vmatpush1.msra.mxu0 0.0
        %881 = vmatprep.subr.mxu0 0.0
        %882 = vmatpush1.msra.mxu0 0.0
        %883 = vmatprep.subr.mxu0 0.0
        %884 = vmatpush1.msra.mxu0 0.0
        %885 = vmatprep.subr.mxu0 0.0
        %886 = vmatpush1.msra.mxu0 0.0
        %887 = vmatprep.subr.mxu0 0.0
        %888 = vmatpush1.msra.mxu0 0.0
        %889 = vmatprep.subr.mxu0 0.0
        %890 = vmatpush1.msra.mxu0 0.0
        %891 = vmatprep.subr.mxu0 0.0
        %892 = vmatpush1.msra.mxu0 0.0
        %893 = vmatprep.subr.mxu0 0.0
        %894 = vmatpush1.msra.mxu0 0.0
        %895 = vmatprep.subr.mxu0 0.0
        %896 = vmatpush1.msra.mxu0 0.0
        %897 = vmatprep.subr.mxu0 0.0
        %898 = vmatpush1.msra.mxu0 0.0
        %899 = vmatprep.subr.mxu0 0.0
        %900 = vmatpush1.msra.mxu0 0.0
        %901 = vmatprep.subr.mxu0 0.0
        %902 = vmatpush1.msra.mxu0 0.0
        %903 = vmatprep.mubr.f32.mxu0 0.0
        %904 = vmatmul.mubr.f32.gmra.mrb[0].mxu0 %v442
        %v905 = vpop.f32.mrb[0].mxu0
        %v906 = vadd.f32 %v681, %v905
        %v907 = vpop.f32.mrb[0].mxu0
        %908 = vmatprep.mubr.f32.mxu0 0.0
        %909 = vmatmul.mubr.f32.gmra.mrb[0].mxu0 %v444
        %v910 = vpop.f32.mrb[0].mxu0
        %v911 = vadd.f32 %v686, %v910
        %v912 = vpop.f32.mrb[0].mxu0
        %913 = vmatprep.mubr.f32.mxu0 0.0
        %914 = vmatmul.mubr.f32.gmra.mrb[0].mxu0 %v447
        %v915 = vpop.f32.mrb[0].mxu0
        %v916 = vadd.f32 %v691, %v915
        %v917 = vpop.f32.mrb[0].mxu0
        %918 = vmatprep.mubr.f32.mxu0 0.0
        %919 = vmatmul.mubr.f32.gmra.mrb[0].mxu0 %v449
        %v920 = vpop.f32.mrb[0].mxu0
        %v921 = vadd.f32 %v696, %v920
        %v922 = vpop.f32.mrb[0].mxu0
        %923 = vmatprep.mubr.f32.mxu0 0.0
        %924 = vmatmul.mubr.f32.gmra.mrb[0].mxu0 %v452
        %v925 = vpop.f32.mrb[0].mxu0
        %v926 = vadd.f32 %v701, %v925
        %v927 = vpop.f32.mrb[0].mxu0
        %928 = vmatprep.mubr.f32.mxu0 0.0
        %929 = vmatmul.mubr.f32.gmra.mrb[0].mxu0 %v454
        %v930 = vpop.f32.mrb[0].mxu0
        %v931 = vadd.f32 %v706, %v930
        %v932 = vpop.f32.mrb[0].mxu0
        %933 = vmatprep.mubr.f32.mxu0 0.0
        %934 = vmatmul.mubr.f32.gmra.mrb[0].mxu0 %v457
        %v935 = vpop.f32.mrb[0].mxu0
        %v936 = vadd.f32 %v711, %v935
        %v937 = vpop.f32.mrb[0].mxu0
        %938 = vmatprep.mubr.f32.mxu0 0.0
        %939 = vmatmul.mubr.f32.gmra.mrb[0].mxu0 %v459
        %v940 = vpop.f32.mrb[0].mxu0
        %v941 = vadd.f32 %v716, %v940
        %v942 = vpop.f32.mrb[0].mxu0
        %943 = vmatprep.mubr.f32.mxu0 0.0
        %944 = vmatmul.mubr.f32.gmra.mrb[0].mxu0 %v462
        %v945 = vpop.f32.mrb[0].mxu0
        %v946 = vadd.f32 %v721, %v945
        %v947 = vpop.f32.mrb[0].mxu0
        %948 = vmatprep.mubr.f32.mxu0 0.0
        %949 = vmatmul.mubr.f32.gmra.mrb[0].mxu0 %v464
        %v950 = vpop.f32.mrb[0].mxu0
        %v951 = vadd.f32 %v726, %v950
        %v952 = vpop.f32.mrb[0].mxu0
        %953 = vmatprep.mubr.f32.mxu0 0.0
        %954 = vmatmul.mubr.f32.gmra.mrb[0].mxu0 %v467
        %v955 = vpop.f32.mrb[0].mxu0
        %v956 = vadd.f32 %v731, %v955
        %v957 = vpop.f32.mrb[0].mxu0
        %958 = vmatprep.mubr.f32.mxu0 0.0
        %959 = vmatmul.mubr.f32.gmra.mrb[0].mxu0 %v469
        %v960 = vpop.f32.mrb[0].mxu0
        %v961 = vadd.f32 %v736, %v960
        %v962 = vpop.f32.mrb[0].mxu0
        %963 = vmatprep.mubr.f32.mxu0 0.0
        %964 = vmatmul.mubr.f32.gmra.mrb[0].mxu0 %v472
        %v965 = vpop.f32.mrb[0].mxu0
        %v966 = vadd.f32 %v741, %v965
        %v967 = vpop.f32.mrb[0].mxu0
        %968 = vmatprep.mubr.f32.mxu0 0.0
        %969 = vmatmul.mubr.f32.gmra.mrb[0].mxu0 %v474
        %v970 = vpop.f32.mrb[0].mxu0
        %v971 = vadd.f32 %v746, %v970
        %v972 = vpop.f32.mrb[0].mxu0
        %973 = vmatprep.mubr.f32.mxu0 0.0
        %974 = vmatmul.mubr.f32.gmra.mrb[0].mxu0 %v477
        %v975 = vpop.f32.mrb[0].mxu0
        %v976 = vadd.f32 %v751, %v975
        %v977 = vpop.f32.mrb[0].mxu0
        %978 = vmatprep.mubr.f32.mxu0 0.0
        %979 = vmatmul.mubr.f32.gmra.mrb[0].mxu0 %v479
        %v980 = vpop.f32.mrb[0].mxu0
        %v981 = vadd.f32 %v756, %v980
        %v982 = vpop.f32.mrb[0].mxu0
        %983 = vmatprep.mubr.f32.mxu0 0.0
        %984 = vmatmul.mubr.f32.gmra.mrb[0].mxu0 %v482
        %v985 = vpop.f32.mrb[0].mxu0
        %v986 = vadd.f32 %v761, %v985
        %v987 = vpop.f32.mrb[0].mxu0
        %988 = vmatprep.mubr.f32.mxu0 0.0
        %989 = vmatmul.mubr.f32.gmra.mrb[0].mxu0 %v484
        %v990 = vpop.f32.mrb[0].mxu0
        %v991 = vadd.f32 %v766, %v990
        %v992 = vpop.f32.mrb[0].mxu0
        %993 = vmatprep.mubr.f32.mxu0 0.0
        %994 = vmatmul.mubr.f32.gmra.mrb[0].mxu0 %v487
        %v995 = vpop.f32.mrb[0].mxu0
        %v996 = vadd.f32 %v771, %v995
        %v997 = vpop.f32.mrb[0].mxu0
        %998 = vmatprep.mubr.f32.mxu0 0.0
        %999 = vmatmul.mubr.f32.gmra.mrb[0].mxu0 %v489
        %v1000 = vpop.f32.mrb[0].mxu0
        %v1001 = vadd.f32 %v776, %v1000
        %v1002 = vpop.f32.mrb[0].mxu0
        %1003 = vmatprep.mubr.f32.mxu0 0.0
        %1004 = vmatmul.mubr.f32.gmra.mrb[0].mxu0 %v492
        %v1005 = vpop.f32.mrb[0].mxu0
        %v1006 = vadd.f32 %v781, %v1005
        %v1007 = vpop.f32.mrb[0].mxu0
        %1008 = vmatprep.mubr.f32.mxu0 0.0
        %1009 = vmatmul.mubr.f32.gmra.mrb[0].mxu0 %v494
        %v1010 = vpop.f32.mrb[0].mxu0
        %v1011 = vadd.f32 %v786, %v1010
        %v1012 = vpop.f32.mrb[0].mxu0
        %1013 = vmatprep.mubr.f32.mxu0 0.0
        %1014 = vmatmul.mubr.f32.gmra.mrb[0].mxu0 %v497
        %v1015 = vpop.f32.mrb[0].mxu0
        %v1016 = vadd.f32 %v791, %v1015
        %v1017 = vpop.f32.mrb[0].mxu0
        %1018 = vmatprep.mubr.f32.mxu0 0.0
        %1019 = vmatmul.mubr.f32.gmra.mrb[0].mxu0 %v499
        %v1020 = vpop.f32.mrb[0].mxu0
        %v1021 = vadd.f32 %v796, %v1020
        %v1022 = vpop.f32.mrb[0].mxu0
        %1023 = vmatprep.mubr.f32.mxu0 0.0
        %1024 = vmatmul.mubr.f32.gmra.mrb[0].mxu0 %v502
        %v1025 = vpop.f32.mrb[0].mxu0
        %v1026 = vadd.f32 %v801, %v1025
        %v1027 = vpop.f32.mrb[0].mxu0
        %1028 = vmatprep.mubr.f32.mxu0 0.0
        %1029 = vmatmul.mubr.f32.gmra.mrb[0].mxu0 %v504
        %v1030 = vpop.f32.mrb[0].mxu0
        %v1031 = vadd.f32 %v806, %v1030
        %v1032 = vpop.f32.mrb[0].mxu0
        %1033 = vmatprep.mubr.f32.mxu0 0.0
        %1034 = vmatmul.mubr.f32.gmra.mrb[0].mxu0 %v507
        %v1035 = vpop.f32.mrb[0].mxu0
        %v1036 = vadd.f32 %v811, %v1035
        %v1037 = vpop.f32.mrb[0].mxu0
        %1038 = vmatprep.mubr.f32.mxu0 0.0
        %1039 = vmatmul.mubr.f32.gmra.mrb[0].mxu0 %v509
        %v1040 = vpop.f32.mrb[0].mxu0
        %v1041 = vadd.f32 %v816, %v1040
        %v1042 = vpop.f32.mrb[0].mxu0
        %1043 = vmatprep.mubr.f32.mxu0 0.0
        %1044 = vmatmul.mubr.f32.gmra.mrb[0].mxu0 %v512
        %v1045 = vpop.f32.mrb[0].mxu0
        %v1046 = vadd.f32 %v821, %v1045
        %v1047 = vpop.f32.mrb[0].mxu0
        %1048 = vmatprep.mubr.f32.mxu0 0.0
        %1049 = vmatmul.mubr.f32.gmra.mrb[0].mxu0 %v514
        %v1050 = vpop.f32.mrb[0].mxu0
        %v1051 = vadd.f32 %v826, %v1050
        %v1052 = vpop.f32.mrb[0].mxu0
        %1053 = vmatprep.mubr.f32.mxu0 0.0
        %1054 = vmatmul.mubr.f32.gmra.mrb[0].mxu0 %v517
        %v1055 = vpop.f32.mrb[0].mxu0
        %v1056 = vadd.f32 %v831, %v1055
        %v1057 = vpop.f32.mrb[0].mxu0
        %1058 = vmatprep.mubr.f32.mxu0 0.0
        %1059 = vmatmul.mubr.f32.gmra.mrb[0].mxu0 %v519
        %v1060 = vpop.f32.mrb[0].mxu0
        %v1061 = vadd.f32 %v836, %v1060
        %v1062 = vpop.f32.mrb[0].mxu0
        %1063 = vdwg.mxu0
        %1064 = vst [vmem:[#allocation2] sm:$0xff] %v906
        %1065 = vst [vmem:[#allocation2 + $0x8] sm:$0xff] %v911
        %1066 = vst [vmem:[#allocation2 + $0x10] sm:$0xff] %v916
        %1067 = vst [vmem:[#allocation2 + $0x18] sm:$0xff] %v921
        %1068 = vst [vmem:[#allocation2 + $0x20] sm:$0xff] %v926
        %1069 = vst [vmem:[#allocation2 + $0x28] sm:$0xff] %v931
        %1070 = vst [vmem:[#allocation2 + $0x30] sm:$0xff] %v936
        %1071 = vst [vmem:[#allocation2 + $0x38] sm:$0xff] %v941
        %1072 = vst [vmem:[#allocation2 + $0x40] sm:$0xff] %v946
        %1073 = vst [vmem:[#allocation2 + $0x48] sm:$0xff] %v951
        %1074 = vst [vmem:[#allocation2 + $0x50] sm:$0xff] %v956
        %1075 = vst [vmem:[#allocation2 + $0x58] sm:$0xff] %v961
        %1076 = vst [vmem:[#allocation2 + $0x60] sm:$0xff] %v966
        %1077 = vst [vmem:[#allocation2 + $0x68] sm:$0xff] %v971
        %1078 = vst [vmem:[#allocation2 + $0x70] sm:$0xff] %v976
        %1079 = vst [vmem:[#allocation2 + $0x78] sm:$0xff] %v981
        %1080 = vst [vmem:[#allocation2 + $0x80] sm:$0xff] %v986
        %1081 = vst [vmem:[#allocation2 + $0x88] sm:$0xff] %v991
        %1082 = vst [vmem:[#allocation2 + $0x90] sm:$0xff] %v996
        %1083 = vst [vmem:[#allocation2 + $0x98] sm:$0xff] %v1001
        %1084 = vst [vmem:[#allocation2 + $0xa0] sm:$0xff] %v1006
        %1085 = vst [vmem:[#allocation2 + $0xa8] sm:$0xff] %v1011
        %1086 = vst [vmem:[#allocation2 + $0xb0] sm:$0xff] %v1016
        %1087 = vst [vmem:[#allocation2 + $0xb8] sm:$0xff] %v1021
        %1088 = vst [vmem:[#allocation2 + $0xc0] sm:$0xff] %v1026
        %1089 = vst [vmem:[#allocation2 + $0xc8] sm:$0xff] %v1031
        %1090 = vst [vmem:[#allocation2 + $0xd0] sm:$0xff] %v1036
        %1091 = vst [vmem:[#allocation2 + $0xd8] sm:$0xff] %v1041
        %1092 = vst [vmem:[#allocation2 + $0xe0] sm:$0xff] %v1046
        %1093 = vst [vmem:[#allocation2 + $0xe8] sm:$0xff] %v1051
        %1094 = vst [vmem:[#allocation2 + $0xf0] sm:$0xff] %v1056
        %1095 = vst [vmem:[#allocation2 + $0xf8] sm:$0xff] %v1061
        %v1096 = vld [vmem:[#allocation2] sm:$0xff]
        %v1097 = vld [vmem:[#allocation2 + $0x8] sm:$0xff]
        %v1098 = vld [vmem:[#allocation2 + $0x10] sm:$0xff]
        %v1099 = vld [vmem:[#allocation2 + $0x18] sm:$0xff]
        %v1100 = vld [vmem:[#allocation2 + $0x20] sm:$0xff]
        %v1101 = vld [vmem:[#allocation2 + $0x28] sm:$0xff]
        %v1102 = vld [vmem:[#allocation2 + $0x30] sm:$0xff]
        %v1103 = vld [vmem:[#allocation2 + $0x38] sm:$0xff]
        %v1104 = vld [vmem:[#allocation2 + $0x40] sm:$0xff]
        %v1105 = vld [vmem:[#allocation2 + $0x48] sm:$0xff]
        %v1106 = vld [vmem:[#allocation2 + $0x50] sm:$0xff]
        %v1107 = vld [vmem:[#allocation2 + $0x58] sm:$0xff]
        %v1108 = vld [vmem:[#allocation2 + $0x60] sm:$0xff]
        %v1109 = vld [vmem:[#allocation2 + $0x68] sm:$0xff]
        %v1110 = vld [vmem:[#allocation2 + $0x70] sm:$0xff]
        %v1111 = vld [vmem:[#allocation2 + $0x78] sm:$0xff]
        %v1112 = vld [vmem:[#allocation2 + $0x80] sm:$0xff]
        %v1113 = vld [vmem:[#allocation2 + $0x88] sm:$0xff]
        %v1114 = vld [vmem:[#allocation2 + $0x90] sm:$0xff]
        %v1115 = vld [vmem:[#allocation2 + $0x98] sm:$0xff]
        %v1116 = vld [vmem:[#allocation2 + $0xa0] sm:$0xff]
        %v1117 = vld [vmem:[#allocation2 + $0xa8] sm:$0xff]
        %v1118 = vld [vmem:[#allocation2 + $0xb0] sm:$0xff]
        %v1119 = vld [vmem:[#allocation2 + $0xb8] sm:$0xff]
        %v1120 = vld [vmem:[#allocation2 + $0xc0] sm:$0xff]
        %v1121 = vld [vmem:[#allocation2 + $0xc8] sm:$0xff]
        %v1122 = vld [vmem:[#allocation2 + $0xd0] sm:$0xff]
        %v1123 = vld [vmem:[#allocation2 + $0xd8] sm:$0xff]
        %v1124 = vld [vmem:[#allocation2 + $0xe0] sm:$0xff]
        %v1125 = vld [vmem:[#allocation2 + $0xe8] sm:$0xff]
        %v1126 = vld [vmem:[#allocation2 + $0xf0] sm:$0xff]
        %v1127 = vld [vmem:[#allocation2 + $0xf8] sm:$0xff]
        %s1128 = scalar_lea.vmem [#allocation6], 384
        %v1129 = vld [vmem:[%s1128] sm:$0xff]
        %v1130 = vld [vmem:[%s1128 + $0x8] sm:$0xff]
        %v1131 = vld [vmem:[%s1128 + $0x10] sm:$0xff]
        %v1132 = vld [vmem:[%s1128 + $0x18] sm:$0xff]
        %v1133 = vld [vmem:[%s1128 + $0x20] sm:$0xff]
        %v1134 = vld [vmem:[%s1128 + $0x28] sm:$0xff]
        %v1135 = vld [vmem:[%s1128 + $0x30] sm:$0xff]
        %v1136 = vld [vmem:[%s1128 + $0x38] sm:$0xff]
        %v1137 = vld [vmem:[%s1128 + $0x40] sm:$0xff]
        %v1138 = vld [vmem:[%s1128 + $0x48] sm:$0xff]
        %v1139 = vld [vmem:[%s1128 + $0x50] sm:$0xff]
        %v1140 = vld [vmem:[%s1128 + $0x58] sm:$0xff]
        %v1141 = vld [vmem:[%s1128 + $0x60] sm:$0xff]
        %v1142 = vld [vmem:[%s1128 + $0x68] sm:$0xff]
        %v1143 = vld [vmem:[%s1128 + $0x70] sm:$0xff]
        %v1144 = vld [vmem:[%s1128 + $0x78] sm:$0xff]
        %v1145 = vld [vmem:[%s1128 + $0x80] sm:$0xff]
        %v1146 = vld [vmem:[%s1128 + $0x88] sm:$0xff]
        %v1147 = vld [vmem:[%s1128 + $0x90] sm:$0xff]
        %v1148 = vld [vmem:[%s1128 + $0x98] sm:$0xff]
        %v1149 = vld [vmem:[%s1128 + $0xa0] sm:$0xff]
        %v1150 = vld [vmem:[%s1128 + $0xa8] sm:$0xff]
        %v1151 = vld [vmem:[%s1128 + $0xb0] sm:$0xff]
        %v1152 = vld [vmem:[%s1128 + $0xb8] sm:$0xff]
        %v1153 = vld [vmem:[%s1128 + $0xc0] sm:$0xff]
        %v1154 = vld [vmem:[%s1128 + $0xc8] sm:$0xff]
        %v1155 = vld [vmem:[%s1128 + $0xd0] sm:$0xff]
        %v1156 = vld [vmem:[%s1128 + $0xd8] sm:$0xff]
        %v1157 = vld [vmem:[%s1128 + $0xe0] sm:$0xff]
        %v1158 = vld [vmem:[%s1128 + $0xe8] sm:$0xff]
        %v1159 = vld [vmem:[%s1128 + $0xf0] sm:$0xff]
        %v1160 = vld [vmem:[%s1128 + $0xf8] sm:$0xff]
        %v1161 = vld [vmem:[%s1128 + $0x100] sm:$0xff]
        %v1162 = vld [vmem:[%s1128 + $0x108] sm:$0xff]
        %v1163 = vld [vmem:[%s1128 + $0x110] sm:$0xff]
        %v1164 = vld [vmem:[%s1128 + $0x118] sm:$0xff]
        %v1165 = vld [vmem:[%s1128 + $0x120] sm:$0xff]
        %v1166 = vld [vmem:[%s1128 + $0x128] sm:$0xff]
        %v1167 = vld [vmem:[%s1128 + $0x130] sm:$0xff]
        %v1168 = vld [vmem:[%s1128 + $0x138] sm:$0xff]
        %v1169 = vld [vmem:[%s1128 + $0x140] sm:$0xff]
        %v1170 = vld [vmem:[%s1128 + $0x148] sm:$0xff]
        %v1171 = vld [vmem:[%s1128 + $0x150] sm:$0xff]
        %v1172 = vld [vmem:[%s1128 + $0x158] sm:$0xff]
        %v1173 = vld [vmem:[%s1128 + $0x160] sm:$0xff]
        %v1174 = vld [vmem:[%s1128 + $0x168] sm:$0xff]
        %v1175 = vld [vmem:[%s1128 + $0x170] sm:$0xff]
        %v1176 = vld [vmem:[%s1128 + $0x178] sm:$0xff]
        %1177 = vmatprep.subr.mxu0 0.0
        %1178 = vmatpush1.msra.mxu0 %v1129
        %1179 = vmatprep.subr.mxu0 0.0
        %1180 = vmatpush1.msra.mxu0 %v1130
        %1181 = vmatprep.subr.mxu0 0.0
        %1182 = vmatpush1.msra.mxu0 %v1131
        %1183 = vmatprep.subr.mxu0 0.0
        %1184 = vmatpush1.msra.mxu0 %v1132
        %1185 = vmatprep.subr.mxu0 0.0
        %1186 = vmatpush1.msra.mxu0 %v1133
        %1187 = vmatprep.subr.mxu0 0.0
        %1188 = vmatpush1.msra.mxu0 %v1134
        %1189 = vmatprep.subr.mxu0 0.0
        %1190 = vmatpush1.msra.mxu0 %v1135
        %1191 = vmatprep.subr.mxu0 0.0
        %1192 = vmatpush1.msra.mxu0 %v1136
        %1193 = vmatprep.subr.mxu0 0.0
        %1194 = vmatpush1.msra.mxu0 %v1137
        %1195 = vmatprep.subr.mxu0 0.0
        %1196 = vmatpush1.msra.mxu0 %v1138
        %1197 = vmatprep.subr.mxu0 0.0
        %1198 = vmatpush1.msra.mxu0 %v1139
        %1199 = vmatprep.subr.mxu0 0.0
        %1200 = vmatpush1.msra.mxu0 %v1140
        %1201 = vmatprep.subr.mxu0 0.0
        %1202 = vmatpush1.msra.mxu0 %v1141
        %1203 = vmatprep.subr.mxu0 0.0
        %1204 = vmatpush1.msra.mxu0 %v1142
        %1205 = vmatprep.subr.mxu0 0.0
        %1206 = vmatpush1.msra.mxu0 %v1143
        %1207 = vmatprep.subr.mxu0 0.0
        %1208 = vmatpush1.msra.mxu0 %v1144
        %1209 = vmatprep.subr.mxu0 0.0
        %1210 = vmatpush1.msra.mxu0 %v1145
        %1211 = vmatprep.subr.mxu0 0.0
        %1212 = vmatpush1.msra.mxu0 %v1146
        %1213 = vmatprep.subr.mxu0 0.0
        %1214 = vmatpush1.msra.mxu0 %v1147
        %1215 = vmatprep.subr.mxu0 0.0
        %1216 = vmatpush1.msra.mxu0 %v1148
        %1217 = vmatprep.subr.mxu0 0.0
        %1218 = vmatpush1.msra.mxu0 %v1149
        %1219 = vmatprep.subr.mxu0 0.0
        %1220 = vmatpush1.msra.mxu0 %v1150
        %1221 = vmatprep.subr.mxu0 0.0
        %1222 = vmatpush1.msra.mxu0 %v1151
        %1223 = vmatprep.subr.mxu0 0.0
        %1224 = vmatpush1.msra.mxu0 %v1152
        %1225 = vmatprep.subr.mxu0 0.0
        %1226 = vmatpush1.msra.mxu0 %v1153
        %1227 = vmatprep.subr.mxu0 0.0
        %1228 = vmatpush1.msra.mxu0 %v1154
        %1229 = vmatprep.subr.mxu0 0.0
        %1230 = vmatpush1.msra.mxu0 %v1155
        %1231 = vmatprep.subr.mxu0 0.0
        %1232 = vmatpush1.msra.mxu0 %v1156
        %1233 = vmatprep.subr.mxu0 0.0
        %1234 = vmatpush1.msra.mxu0 %v1157
        %1235 = vmatprep.subr.mxu0 0.0
        %1236 = vmatpush1.msra.mxu0 %v1158
        %1237 = vmatprep.subr.mxu0 0.0
        %1238 = vmatpush1.msra.mxu0 %v1159
        %1239 = vmatprep.subr.mxu0 0.0
        %1240 = vmatpush1.msra.mxu0 %v1160
        %1241 = vmatprep.mubr.f32.mxu0 %v320
        %1242 = vmatmul.mubr.f32.gmra.mrb[0].mxu0 %v207
        %v1243 = vpop.f32.mrb[0].mxu0
        %v1244 = vadd.f32 0.0, %v1243
        %v1245 = vpop.f32.mrb[0].mxu0
        %1246 = vmatprep.mubr.f32.mxu0 %v322
        %1247 = vmatmul.mubr.f32.gmra.mrb[0].mxu0 %v208
        %v1248 = vpop.f32.mrb[0].mxu0
        %v1249 = vadd.f32 0.0, %v1248
        %v1250 = vpop.f32.mrb[0].mxu0
        %1251 = vmatprep.mubr.f32.mxu0 %v325
        %1252 = vmatmul.mubr.f32.gmra.mrb[0].mxu0 %v210
        %v1253 = vpop.f32.mrb[0].mxu0
        %v1254 = vadd.f32 0.0, %v1253
        %v1255 = vpop.f32.mrb[0].mxu0
        %1256 = vmatprep.mubr.f32.mxu0 %v327
        %1257 = vmatmul.mubr.f32.gmra.mrb[0].mxu0 %v211
        %v1258 = vpop.f32.mrb[0].mxu0
        %v1259 = vadd.f32 0.0, %v1258
        %v1260 = vpop.f32.mrb[0].mxu0
        %1261 = vmatprep.mubr.f32.mxu0 %v330
        %1262 = vmatmul.mubr.f32.gmra.mrb[0].mxu0 %v213
        %v1263 = vpop.f32.mrb[0].mxu0
        %v1264 = vadd.f32 0.0, %v1263
        %v1265 = vpop.f32.mrb[0].mxu0
        %1266 = vmatprep.mubr.f32.mxu0 %v332
        %1267 = vmatmul.mubr.f32.gmra.mrb[0].mxu0 %v214
        %v1268 = vpop.f32.mrb[0].mxu0
        %v1269 = vadd.f32 0.0, %v1268
        %v1270 = vpop.f32.mrb[0].mxu0
        %1271 = vmatprep.mubr.f32.mxu0 %v335
        %1272 = vmatmul.mubr.f32.gmra.mrb[0].mxu0 %v216
        %v1273 = vpop.f32.mrb[0].mxu0
        %v1274 = vadd.f32 0.0, %v1273
        %v1275 = vpop.f32.mrb[0].mxu0
        %1276 = vmatprep.mubr.f32.mxu0 %v337
        %1277 = vmatmul.mubr.f32.gmra.mrb[0].mxu0 %v217
        %v1278 = vpop.f32.mrb[0].mxu0
        %v1279 = vadd.f32 0.0, %v1278
        %v1280 = vpop.f32.mrb[0].mxu0
        %1281 = vmatprep.mubr.f32.mxu0 %v340
        %1282 = vmatmul.mubr.f32.gmra.mrb[0].mxu0 %v219
        %v1283 = vpop.f32.mrb[0].mxu0
        %v1284 = vadd.f32 0.0, %v1283
        %v1285 = vpop.f32.mrb[0].mxu0
        %1286 = vmatprep.mubr.f32.mxu0 %v342
        %1287 = vmatmul.mubr.f32.gmra.mrb[0].mxu0 %v220
        %v1288 = vpop.f32.mrb[0].mxu0
        %v1289 = vadd.f32 0.0, %v1288
        %v1290 = vpop.f32.mrb[0].mxu0
        %1291 = vmatprep.mubr.f32.mxu0 %v345
        %1292 = vmatmul.mubr.f32.gmra.mrb[0].mxu0 %v222
        %v1293 = vpop.f32.mrb[0].mxu0
        %v1294 = vadd.f32 0.0, %v1293
        %v1295 = vpop.f32.mrb[0].mxu0
        %1296 = vmatprep.mubr.f32.mxu0 %v347
        %1297 = vmatmul.mubr.f32.gmra.mrb[0].mxu0 %v223
        %v1298 = vpop.f32.mrb[0].mxu0
        %v1299 = vadd.f32 0.0, %v1298
        %v1300 = vpop.f32.mrb[0].mxu0
        %1301 = vmatprep.mubr.f32.mxu0 %v350
        %1302 = vmatmul.mubr.f32.gmra.mrb[0].mxu0 %v225
        %v1303 = vpop.f32.mrb[0].mxu0
        %v1304 = vadd.f32 0.0, %v1303
        %v1305 = vpop.f32.mrb[0].mxu0
        %1306 = vmatprep.mubr.f32.mxu0 %v352
        %1307 = vmatmul.mubr.f32.gmra.mrb[0].mxu0 %v226
        %v1308 = vpop.f32.mrb[0].mxu0
        %v1309 = vadd.f32 0.0, %v1308
        %v1310 = vpop.f32.mrb[0].mxu0
        %1311 = vmatprep.mubr.f32.mxu0 %v355
        %1312 = vmatmul.mubr.f32.gmra.mrb[0].mxu0 %v228
        %v1313 = vpop.f32.mrb[0].mxu0
        %v1314 = vadd.f32 0.0, %v1313
        %v1315 = vpop.f32.mrb[0].mxu0
        %1316 = vmatprep.mubr.f32.mxu0 %v357
        %1317 = vmatmul.mubr.f32.gmra.mrb[0].mxu0 %v229
        %v1318 = vpop.f32.mrb[0].mxu0
        %v1319 = vadd.f32 0.0, %v1318
        %v1320 = vpop.f32.mrb[0].mxu0
        %1321 = vmatprep.mubr.f32.mxu0 %v360
        %1322 = vmatmul.mubr.f32.gmra.mrb[0].mxu0 %v231
        %v1323 = vpop.f32.mrb[0].mxu0
        %v1324 = vadd.f32 0.0, %v1323
        %v1325 = vpop.f32.mrb[0].mxu0
        %1326 = vmatprep.mubr.f32.mxu0 %v362
        %1327 = vmatmul.mubr.f32.gmra.mrb[0].mxu0 %v232
        %v1328 = vpop.f32.mrb[0].mxu0
        %v1329 = vadd.f32 0.0, %v1328
        %v1330 = vpop.f32.mrb[0].mxu0
        %1331 = vmatprep.mubr.f32.mxu0 %v365
        %1332 = vmatmul.mubr.f32.gmra.mrb[0].mxu0 %v234
        %v1333 = vpop.f32.mrb[0].mxu0
        %v1334 = vadd.f32 0.0, %v1333
        %v1335 = vpop.f32.mrb[0].mxu0
        %1336 = vmatprep.mubr.f32.mxu0 %v367
        %1337 = vmatmul.mubr.f32.gmra.mrb[0].mxu0 %v235
        %v1338 = vpop.f32.mrb[0].mxu0
        %v1339 = vadd.f32 0.0, %v1338
        %v1340 = vpop.f32.mrb[0].mxu0
        %1341 = vmatprep.mubr.f32.mxu0 %v370
        %1342 = vmatmul.mubr.f32.gmra.mrb[0].mxu0 %v237
        %v1343 = vpop.f32.mrb[0].mxu0
        %v1344 = vadd.f32 0.0, %v1343
        %v1345 = vpop.f32.mrb[0].mxu0
        %1346 = vmatprep.mubr.f32.mxu0 %v372
        %1347 = vmatmul.mubr.f32.gmra.mrb[0].mxu0 %v238
        %v1348 = vpop.f32.mrb[0].mxu0
        %v1349 = vadd.f32 0.0, %v1348
        %v1350 = vpop.f32.mrb[0].mxu0
        %1351 = vmatprep.mubr.f32.mxu0 %v375
        %1352 = vmatmul.mubr.f32.gmra.mrb[0].mxu0 %v240
        %v1353 = vpop.f32.mrb[0].mxu0
        %v1354 = vadd.f32 0.0, %v1353
        %v1355 = vpop.f32.mrb[0].mxu0
        %1356 = vmatprep.mubr.f32.mxu0 %v377
        %1357 = vmatmul.mubr.f32.gmra.mrb[0].mxu0 %v241
        %v1358 = vpop.f32.mrb[0].mxu0
        %v1359 = vadd.f32 0.0, %v1358
        %v1360 = vpop.f32.mrb[0].mxu0
        %1361 = vmatprep.mubr.f32.mxu0 %v380
        %1362 = vmatmul.mubr.f32.gmra.mrb[0].mxu0 %v243
        %v1363 = vpop.f32.mrb[0].mxu0
        %v1364 = vadd.f32 0.0, %v1363
        %v1365 = vpop.f32.mrb[0].mxu0
        %1366 = vmatprep.mubr.f32.mxu0 %v382
        %1367 = vmatmul.mubr.f32.gmra.mrb[0].mxu0 %v244
        %v1368 = vpop.f32.mrb[0].mxu0
        %v1369 = vadd.f32 0.0, %v1368
        %v1370 = vpop.f32.mrb[0].mxu0
        %1371 = vmatprep.mubr.f32.mxu0 %v385
        %1372 = vmatmul.mubr.f32.gmra.mrb[0].mxu0 %v246
        %v1373 = vpop.f32.mrb[0].mxu0
        %v1374 = vadd.f32 0.0, %v1373
        %v1375 = vpop.f32.mrb[0].mxu0
        %1376 = vmatprep.mubr.f32.mxu0 %v387
        %1377 = vmatmul.mubr.f32.gmra.mrb[0].mxu0 %v247
        %v1378 = vpop.f32.mrb[0].mxu0
        %v1379 = vadd.f32 0.0, %v1378
        %v1380 = vpop.f32.mrb[0].mxu0
        %1381 = vmatprep.mubr.f32.mxu0 %v390
        %1382 = vmatmul.mubr.f32.gmra.mrb[0].mxu0 %v249
        %v1383 = vpop.f32.mrb[0].mxu0
        %v1384 = vadd.f32 0.0, %v1383
        %v1385 = vpop.f32.mrb[0].mxu0
        %1386 = vmatprep.mubr.f32.mxu0 %v392
        %1387 = vmatmul.mubr.f32.gmra.mrb[0].mxu0 %v250
        %v1388 = vpop.f32.mrb[0].mxu0
        %v1389 = vadd.f32 0.0, %v1388
        %v1390 = vpop.f32.mrb[0].mxu0
        %1391 = vmatprep.mubr.f32.mxu0 %v395
        %1392 = vmatmul.mubr.f32.gmra.mrb[0].mxu0 %v252
        %v1393 = vpop.f32.mrb[0].mxu0
        %v1394 = vadd.f32 0.0, %v1393
        %v1395 = vpop.f32.mrb[0].mxu0
        %1396 = vmatprep.mubr.f32.mxu0 %v397
        %1397 = vmatmul.mubr.f32.gmra.mrb[0].mxu0 %v253
        %v1398 = vpop.f32.mrb[0].mxu0
        %v1399 = vadd.f32 0.0, %v1398
        %v1400 = vpop.f32.mrb[0].mxu0
        %1401 = vdwg.mxu0
        %1402 = vmatprep.subr.mxu0 0.0
        %1403 = vmatpush1.msra.mxu0 %v1161
        %1404 = vmatprep.subr.mxu0 0.0
        %1405 = vmatpush1.msra.mxu0 %v1162
        %1406 = vmatprep.subr.mxu0 0.0
        %1407 = vmatpush1.msra.mxu0 %v1163
        %1408 = vmatprep.subr.mxu0 0.0
        %1409 = vmatpush1.msra.mxu0 %v1164
        %1410 = vmatprep.subr.mxu0 0.0
        %1411 = vmatpush1.msra.mxu0 %v1165
        %1412 = vmatprep.subr.mxu0 0.0
        %1413 = vmatpush1.msra.mxu0 %v1166
        %1414 = vmatprep.subr.mxu0 0.0
        %1415 = vmatpush1.msra.mxu0 %v1167
        %1416 = vmatprep.subr.mxu0 0.0
        %1417 = vmatpush1.msra.mxu0 %v1168
        %1418 = vmatprep.subr.mxu0 0.0
        %1419 = vmatpush1.msra.mxu0 %v1169
        %1420 = vmatprep.subr.mxu0 0.0
        %1421 = vmatpush1.msra.mxu0 %v1170
        %1422 = vmatprep.subr.mxu0 0.0
        %1423 = vmatpush1.msra.mxu0 %v1171
        %1424 = vmatprep.subr.mxu0 0.0
        %1425 = vmatpush1.msra.mxu0 %v1172
        %1426 = vmatprep.subr.mxu0 0.0
        %1427 = vmatpush1.msra.mxu0 %v1173
        %1428 = vmatprep.subr.mxu0 0.0
        %1429 = vmatpush1.msra.mxu0 %v1174
        %1430 = vmatprep.subr.mxu0 0.0
        %1431 = vmatpush1.msra.mxu0 %v1175
        %1432 = vmatprep.subr.mxu0 0.0
        %1433 = vmatpush1.msra.mxu0 %v1176
        %1434 = vmatprep.subr.mxu0 0.0
        %1435 = vmatpush1.msra.mxu0 0.0
        %1436 = vmatprep.subr.mxu0 0.0
        %1437 = vmatpush1.msra.mxu0 0.0
        %1438 = vmatprep.subr.mxu0 0.0
        %1439 = vmatpush1.msra.mxu0 0.0
        %1440 = vmatprep.subr.mxu0 0.0
        %1441 = vmatpush1.msra.mxu0 0.0
        %1442 = vmatprep.subr.mxu0 0.0
        %1443 = vmatpush1.msra.mxu0 0.0
        %1444 = vmatprep.subr.mxu0 0.0
        %1445 = vmatpush1.msra.mxu0 0.0
        %1446 = vmatprep.subr.mxu0 0.0
        %1447 = vmatpush1.msra.mxu0 0.0
        %1448 = vmatprep.subr.mxu0 0.0
        %1449 = vmatpush1.msra.mxu0 0.0
        %1450 = vmatprep.subr.mxu0 0.0
        %1451 = vmatpush1.msra.mxu0 0.0
        %1452 = vmatprep.subr.mxu0 0.0
        %1453 = vmatpush1.msra.mxu0 0.0
        %1454 = vmatprep.subr.mxu0 0.0
        %1455 = vmatpush1.msra.mxu0 0.0
        %1456 = vmatprep.subr.mxu0 0.0
        %1457 = vmatpush1.msra.mxu0 0.0
        %1458 = vmatprep.subr.mxu0 0.0
        %1459 = vmatpush1.msra.mxu0 0.0
        %1460 = vmatprep.subr.mxu0 0.0
        %1461 = vmatpush1.msra.mxu0 0.0
        %1462 = vmatprep.subr.mxu0 0.0
        %1463 = vmatpush1.msra.mxu0 0.0
        %1464 = vmatprep.subr.mxu0 0.0
        %1465 = vmatpush1.msra.mxu0 0.0
        %1466 = vmatprep.mubr.f32.mxu0 0.0
        %1467 = vmatmul.mubr.f32.gmra.mrb[0].mxu0 %v447
        %v1468 = vpop.f32.mrb[0].mxu0
        %v1469 = vadd.f32 %v1244, %v1468
        %v1470 = vpop.f32.mrb[0].mxu0
        %1471 = vmatprep.mubr.f32.mxu0 0.0
        %1472 = vmatmul.mubr.f32.gmra.mrb[0].mxu0 %v449
        %v1473 = vpop.f32.mrb[0].mxu0
        %v1474 = vadd.f32 %v1249, %v1473
        %v1475 = vpop.f32.mrb[0].mxu0
        %1476 = vmatprep.mubr.f32.mxu0 0.0
        %1477 = vmatmul.mubr.f32.gmra.mrb[0].mxu0 %v452
        %v1478 = vpop.f32.mrb[0].mxu0
        %v1479 = vadd.f32 %v1254, %v1478
        %v1480 = vpop.f32.mrb[0].mxu0
        %1481 = vmatprep.mubr.f32.mxu0 0.0
        %1482 = vmatmul.mubr.f32.gmra.mrb[0].mxu0 %v454
        %v1483 = vpop.f32.mrb[0].mxu0
        %v1484 = vadd.f32 %v1259, %v1483
        %v1485 = vpop.f32.mrb[0].mxu0
        %1486 = vmatprep.mubr.f32.mxu0 0.0
        %1487 = vmatmul.mubr.f32.gmra.mrb[0].mxu0 %v457
        %v1488 = vpop.f32.mrb[0].mxu0
        %v1489 = vadd.f32 %v1264, %v1488
        %v1490 = vpop.f32.mrb[0].mxu0
        %1491 = vmatprep.mubr.f32.mxu0 0.0
        %1492 = vmatmul.mubr.f32.gmra.mrb[0].mxu0 %v459
        %v1493 = vpop.f32.mrb[0].mxu0
        %v1494 = vadd.f32 %v1269, %v1493
        %v1495 = vpop.f32.mrb[0].mxu0
        %1496 = vmatprep.mubr.f32.mxu0 0.0
        %1497 = vmatmul.mubr.f32.gmra.mrb[0].mxu0 %v462
        %v1498 = vpop.f32.mrb[0].mxu0
        %v1499 = vadd.f32 %v1274, %v1498
        %v1500 = vpop.f32.mrb[0].mxu0
        %1501 = vmatprep.mubr.f32.mxu0 0.0
        %1502 = vmatmul.mubr.f32.gmra.mrb[0].mxu0 %v464
        %v1503 = vpop.f32.mrb[0].mxu0
        %v1504 = vadd.f32 %v1279, %v1503
        %v1505 = vpop.f32.mrb[0].mxu0
        %1506 = vmatprep.mubr.f32.mxu0 0.0
        %1507 = vmatmul.mubr.f32.gmra.mrb[0].mxu0 %v467
        %v1508 = vpop.f32.mrb[0].mxu0
        %v1509 = vadd.f32 %v1284, %v1508
        %v1510 = vpop.f32.mrb[0].mxu0
        %1511 = vmatprep.mubr.f32.mxu0 0.0
        %1512 = vmatmul.mubr.f32.gmra.mrb[0].mxu0 %v469
        %v1513 = vpop.f32.mrb[0].mxu0
        %v1514 = vadd.f32 %v1289, %v1513
        %v1515 = vpop.f32.mrb[0].mxu0
        %1516 = vmatprep.mubr.f32.mxu0 0.0
        %1517 = vmatmul.mubr.f32.gmra.mrb[0].mxu0 %v472
        %v1518 = vpop.f32.mrb[0].mxu0
        %v1519 = vadd.f32 %v1294, %v1518
        %v1520 = vpop.f32.mrb[0].mxu0
        %1521 = vmatprep.mubr.f32.mxu0 0.0
        %1522 = vmatmul.mubr.f32.gmra.mrb[0].mxu0 %v474
        %v1523 = vpop.f32.mrb[0].mxu0
        %v1524 = vadd.f32 %v1299, %v1523
        %v1525 = vpop.f32.mrb[0].mxu0
        %1526 = vmatprep.mubr.f32.mxu0 0.0
        %1527 = vmatmul.mubr.f32.gmra.mrb[0].mxu0 %v477
        %v1528 = vpop.f32.mrb[0].mxu0
        %v1529 = vadd.f32 %v1304, %v1528
        %v1530 = vpop.f32.mrb[0].mxu0
        %1531 = vmatprep.mubr.f32.mxu0 0.0
        %1532 = vmatmul.mubr.f32.gmra.mrb[0].mxu0 %v479
        %v1533 = vpop.f32.mrb[0].mxu0
        %v1534 = vadd.f32 %v1309, %v1533
        %v1535 = vpop.f32.mrb[0].mxu0
        %1536 = vmatprep.mubr.f32.mxu0 0.0
        %1537 = vmatmul.mubr.f32.gmra.mrb[0].mxu0 %v482
        %v1538 = vpop.f32.mrb[0].mxu0
        %v1539 = vadd.f32 %v1314, %v1538
        %v1540 = vpop.f32.mrb[0].mxu0
        %1541 = vmatprep.mubr.f32.mxu0 0.0
        %1542 = vmatmul.mubr.f32.gmra.mrb[0].mxu0 %v484
        %v1543 = vpop.f32.mrb[0].mxu0
        %v1544 = vadd.f32 %v1319, %v1543
        %v1545 = vpop.f32.mrb[0].mxu0
        %1546 = vmatprep.mubr.f32.mxu0 0.0
        %1547 = vmatmul.mubr.f32.gmra.mrb[0].mxu0 %v487
        %v1548 = vpop.f32.mrb[0].mxu0
        %v1549 = vadd.f32 %v1324, %v1548
        %v1550 = vpop.f32.mrb[0].mxu0
        %1551 = vmatprep.mubr.f32.mxu0 0.0
        %1552 = vmatmul.mubr.f32.gmra.mrb[0].mxu0 %v489
        %v1553 = vpop.f32.mrb[0].mxu0
        %v1554 = vadd.f32 %v1329, %v1553
        %v1555 = vpop.f32.mrb[0].mxu0
        %1556 = vmatprep.mubr.f32.mxu0 0.0
        %1557 = vmatmul.mubr.f32.gmra.mrb[0].mxu0 %v492
        %v1558 = vpop.f32.mrb[0].mxu0
        %v1559 = vadd.f32 %v1334, %v1558
        %v1560 = vpop.f32.mrb[0].mxu0
        %1561 = vmatprep.mubr.f32.mxu0 0.0
        %1562 = vmatmul.mubr.f32.gmra.mrb[0].mxu0 %v494
        %v1563 = vpop.f32.mrb[0].mxu0
        %v1564 = vadd.f32 %v1339, %v1563
        %v1565 = vpop.f32.mrb[0].mxu0
        %1566 = vmatprep.mubr.f32.mxu0 0.0
        %1567 = vmatmul.mubr.f32.gmra.mrb[0].mxu0 %v497
        %v1568 = vpop.f32.mrb[0].mxu0
        %v1569 = vadd.f32 %v1344, %v1568
        %v1570 = vpop.f32.mrb[0].mxu0
        %1571 = vmatprep.mubr.f32.mxu0 0.0
        %1572 = vmatmul.mubr.f32.gmra.mrb[0].mxu0 %v499
        %v1573 = vpop.f32.mrb[0].mxu0
        %v1574 = vadd.f32 %v1349, %v1573
        %v1575 = vpop.f32.mrb[0].mxu0
        %1576 = vmatprep.mubr.f32.mxu0 0.0
        %1577 = vmatmul.mubr.f32.gmra.mrb[0].mxu0 %v502
        %v1578 = vpop.f32.mrb[0].mxu0
        %v1579 = vadd.f32 %v1354, %v1578
        %v1580 = vpop.f32.mrb[0].mxu0
        %1581 = vmatprep.mubr.f32.mxu0 0.0
        %1582 = vmatmul.mubr.f32.gmra.mrb[0].mxu0 %v504
        %v1583 = vpop.f32.mrb[0].mxu0
        %v1584 = vadd.f32 %v1359, %v1583
        %v1585 = vpop.f32.mrb[0].mxu0
        %1586 = vmatprep.mubr.f32.mxu0 0.0
        %1587 = vmatmul.mubr.f32.gmra.mrb[0].mxu0 %v507
        %v1588 = vpop.f32.mrb[0].mxu0
        %v1589 = vadd.f32 %v1364, %v1588
        %v1590 = vpop.f32.mrb[0].mxu0
        %1591 = vmatprep.mubr.f32.mxu0 0.0
        %1592 = vmatmul.mubr.f32.gmra.mrb[0].mxu0 %v509
        %v1593 = vpop.f32.mrb[0].mxu0
        %v1594 = vadd.f32 %v1369, %v1593
        %v1595 = vpop.f32.mrb[0].mxu0
        %1596 = vmatprep.mubr.f32.mxu0 0.0
        %1597 = vmatmul.mubr.f32.gmra.mrb[0].mxu0 %v512
        %v1598 = vpop.f32.mrb[0].mxu0
        %v1599 = vadd.f32 %v1374, %v1598
        %v1600 = vpop.f32.mrb[0].mxu0
        %1601 = vmatprep.mubr.f32.mxu0 0.0
        %1602 = vmatmul.mubr.f32.gmra.mrb[0].mxu0 %v514
        %v1603 = vpop.f32.mrb[0].mxu0
        %v1604 = vadd.f32 %v1379, %v1603
        %v1605 = vpop.f32.mrb[0].mxu0
        %1606 = vmatprep.mubr.f32.mxu0 0.0
        %1607 = vmatmul.mubr.f32.gmra.mrb[0].mxu0 %v517
        %v1608 = vpop.f32.mrb[0].mxu0
        %v1609 = vadd.f32 %v1384, %v1608
        %v1610 = vpop.f32.mrb[0].mxu0
        %1611 = vmatprep.mubr.f32.mxu0 0.0
        %1612 = vmatmul.mubr.f32.gmra.mrb[0].mxu0 %v519
        %v1613 = vpop.f32.mrb[0].mxu0
        %v1614 = vadd.f32 %v1389, %v1613
        %v1615 = vpop.f32.mrb[0].mxu0
        %1616 = vmatprep.mubr.f32.mxu0 0.0
        %1617 = vmatmul.mubr.f32.gmra.mrb[0].mxu0 %v522
        %v1618 = vpop.f32.mrb[0].mxu0
        %v1619 = vadd.f32 %v1394, %v1618
        %v1620 = vpop.f32.mrb[0].mxu0
        %1621 = vmatprep.mubr.f32.mxu0 0.0
        %1622 = vmatmul.mubr.f32.gmra.mrb[0].mxu0 %v524
        %v1623 = vpop.f32.mrb[0].mxu0
        %v1624 = vadd.f32 %v1399, %v1623
        %v1625 = vpop.f32.mrb[0].mxu0
        %1626 = vdwg.mxu0
        %v1627 = vadd.f32 %v1096, %v1469
        %v1628 = vadd.f32 %v1097, %v1474
        %v1629 = vadd.f32 %v1098, %v1479
        %v1630 = vadd.f32 %v1099, %v1484
        %v1631 = vadd.f32 %v1100, %v1489
        %v1632 = vadd.f32 %v1101, %v1494
        %v1633 = vadd.f32 %v1102, %v1499
        %v1634 = vadd.f32 %v1103, %v1504
        %v1635 = vadd.f32 %v1104, %v1509
        %v1636 = vadd.f32 %v1105, %v1514
        %v1637 = vadd.f32 %v1106, %v1519
        %v1638 = vadd.f32 %v1107, %v1524
        %v1639 = vadd.f32 %v1108, %v1529
        %v1640 = vadd.f32 %v1109, %v1534
        %v1641 = vadd.f32 %v1110, %v1539
        %v1642 = vadd.f32 %v1111, %v1544
        %v1643 = vadd.f32 %v1112, %v1549
        %v1644 = vadd.f32 %v1113, %v1554
        %v1645 = vadd.f32 %v1114, %v1559
        %v1646 = vadd.f32 %v1115, %v1564
        %v1647 = vadd.f32 %v1116, %v1569
        %v1648 = vadd.f32 %v1117, %v1574
        %v1649 = vadd.f32 %v1118, %v1579
        %v1650 = vadd.f32 %v1119, %v1584
        %v1651 = vadd.f32 %v1120, %v1589
        %v1652 = vadd.f32 %v1121, %v1594
        %v1653 = vadd.f32 %v1122, %v1599
        %v1654 = vadd.f32 %v1123, %v1604
        %v1655 = vadd.f32 %v1124, %v1609
        %v1656 = vadd.f32 %v1125, %v1614
        %v1657 = vadd.f32 %v1126, %v1619
        %v1658 = vadd.f32 %v1127, %v1624
        %1659 = vst [vmem:[#allocation2] sm:$0xff] %v1627
        %1660 = vst [vmem:[#allocation2 + $0x8] sm:$0xff] %v1628
        %1661 = vst [vmem:[#allocation2 + $0x10] sm:$0xff] %v1629
        %1662 = vst [vmem:[#allocation2 + $0x18] sm:$0xff] %v1630
        %1663 = vst [vmem:[#allocation2 + $0x20] sm:$0xff] %v1631
        %1664 = vst [vmem:[#allocation2 + $0x28] sm:$0xff] %v1632
        %1665 = vst [vmem:[#allocation2 + $0x30] sm:$0xff] %v1633
        %1666 = vst [vmem:[#allocation2 + $0x38] sm:$0xff] %v1634
        %1667 = vst [vmem:[#allocation2 + $0x40] sm:$0xff] %v1635
        %1668 = vst [vmem:[#allocation2 + $0x48] sm:$0xff] %v1636
        %1669 = vst [vmem:[#allocation2 + $0x50] sm:$0xff] %v1637
        %1670 = vst [vmem:[#allocation2 + $0x58] sm:$0xff] %v1638
        %1671 = vst [vmem:[#allocation2 + $0x60] sm:$0xff] %v1639
        %1672 = vst [vmem:[#allocation2 + $0x68] sm:$0xff] %v1640
        %1673 = vst [vmem:[#allocation2 + $0x70] sm:$0xff] %v1641
        %1674 = vst [vmem:[#allocation2 + $0x78] sm:$0xff] %v1642
        %1675 = vst [vmem:[#allocation2 + $0x80] sm:$0xff] %v1643
        %1676 = vst [vmem:[#allocation2 + $0x88] sm:$0xff] %v1644
        %1677 = vst [vmem:[#allocation2 + $0x90] sm:$0xff] %v1645
        %1678 = vst [vmem:[#allocation2 + $0x98] sm:$0xff] %v1646
        %1679 = vst [vmem:[#allocation2 + $0xa0] sm:$0xff] %v1647
        %1680 = vst [vmem:[#allocation2 + $0xa8] sm:$0xff] %v1648
        %1681 = vst [vmem:[#allocation2 + $0xb0] sm:$0xff] %v1649
        %1682 = vst [vmem:[#allocation2 + $0xb8] sm:$0xff] %v1650
        %1683 = vst [vmem:[#allocation2 + $0xc0] sm:$0xff] %v1651
        %1684 = vst [vmem:[#allocation2 + $0xc8] sm:$0xff] %v1652
        %1685 = vst [vmem:[#allocation2 + $0xd0] sm:$0xff] %v1653
        %1686 = vst [vmem:[#allocation2 + $0xd8] sm:$0xff] %v1654
        %1687 = vst [vmem:[#allocation2 + $0xe0] sm:$0xff] %v1655
        %1688 = vst [vmem:[#allocation2 + $0xe8] sm:$0xff] %v1656
        %1689 = vst [vmem:[#allocation2 + $0xf0] sm:$0xff] %v1657
        %1690 = vst [vmem:[#allocation2 + $0xf8] sm:$0xff] %v1658
        %v1691 = vld [vmem:[#allocation2] sm:$0xff]
        %v1692 = vld [vmem:[#allocation2 + $0x8] sm:$0xff]
        %v1693 = vld [vmem:[#allocation2 + $0x10] sm:$0xff]
        %v1694 = vld [vmem:[#allocation2 + $0x18] sm:$0xff]
        %v1695 = vld [vmem:[#allocation2 + $0x20] sm:$0xff]
        %v1696 = vld [vmem:[#allocation2 + $0x28] sm:$0xff]
        %v1697 = vld [vmem:[#allocation2 + $0x30] sm:$0xff]
        %v1698 = vld [vmem:[#allocation2 + $0x38] sm:$0xff]
        %v1699 = vld [vmem:[#allocation2 + $0x40] sm:$0xff]
        %v1700 = vld [vmem:[#allocation2 + $0x48] sm:$0xff]
        %v1701 = vld [vmem:[#allocation2 + $0x50] sm:$0xff]
        %v1702 = vld [vmem:[#allocation2 + $0x58] sm:$0xff]
        %v1703 = vld [vmem:[#allocation2 + $0x60] sm:$0xff]
        %v1704 = vld [vmem:[#allocation2 + $0x68] sm:$0xff]
        %v1705 = vld [vmem:[#allocation2 + $0x70] sm:$0xff]
        %v1706 = vld [vmem:[#allocation2 + $0x78] sm:$0xff]
        %v1707 = vld [vmem:[#allocation2 + $0x80] sm:$0xff]
        %v1708 = vld [vmem:[#allocation2 + $0x88] sm:$0xff]
        %v1709 = vld [vmem:[#allocation2 + $0x90] sm:$0xff]
        %v1710 = vld [vmem:[#allocation2 + $0x98] sm:$0xff]
        %v1711 = vld [vmem:[#allocation2 + $0xa0] sm:$0xff]
        %v1712 = vld [vmem:[#allocation2 + $0xa8] sm:$0xff]
        %v1713 = vld [vmem:[#allocation2 + $0xb0] sm:$0xff]
        %v1714 = vld [vmem:[#allocation2 + $0xb8] sm:$0xff]
        %v1715 = vld [vmem:[#allocation2 + $0xc0] sm:$0xff]
        %v1716 = vld [vmem:[#allocation2 + $0xc8] sm:$0xff]
        %v1717 = vld [vmem:[#allocation2 + $0xd0] sm:$0xff]
        %v1718 = vld [vmem:[#allocation2 + $0xd8] sm:$0xff]
        %v1719 = vld [vmem:[#allocation2 + $0xe0] sm:$0xff]
        %v1720 = vld [vmem:[#allocation2 + $0xe8] sm:$0xff]
        %v1721 = vld [vmem:[#allocation2 + $0xf0] sm:$0xff]
        %v1722 = vld [vmem:[#allocation2 + $0xf8] sm:$0xff]
        %s1723 = scalar_lea.vmem [#allocation6], 768
        %v1724 = vld [vmem:[%s1723] sm:$0xff]
        %v1725 = vld [vmem:[%s1723 + $0x8] sm:$0xff]
        %v1726 = vld [vmem:[%s1723 + $0x10] sm:$0xff]
        %v1727 = vld [vmem:[%s1723 + $0x18] sm:$0xff]
        %v1728 = vld [vmem:[%s1723 + $0x20] sm:$0xff]
        %v1729 = vld [vmem:[%s1723 + $0x28] sm:$0xff]
        %v1730 = vld [vmem:[%s1723 + $0x30] sm:$0xff]
        %v1731 = vld [vmem:[%s1723 + $0x38] sm:$0xff]
        %v1732 = vld [vmem:[%s1723 + $0x40] sm:$0xff]
        %v1733 = vld [vmem:[%s1723 + $0x48] sm:$0xff]
        %v1734 = vld [vmem:[%s1723 + $0x50] sm:$0xff]
        %v1735 = vld [vmem:[%s1723 + $0x58] sm:$0xff]
        %v1736 = vld [vmem:[%s1723 + $0x60] sm:$0xff]
        %v1737 = vld [vmem:[%s1723 + $0x68] sm:$0xff]
        %v1738 = vld [vmem:[%s1723 + $0x70] sm:$0xff]
        %v1739 = vld [vmem:[%s1723 + $0x78] sm:$0xff]
        %v1740 = vld [vmem:[%s1723 + $0x80] sm:$0xff]
        %v1741 = vld [vmem:[%s1723 + $0x88] sm:$0xff]
        %v1742 = vld [vmem:[%s1723 + $0x90] sm:$0xff]
        %v1743 = vld [vmem:[%s1723 + $0x98] sm:$0xff]
        %v1744 = vld [vmem:[%s1723 + $0xa0] sm:$0xff]
        %v1745 = vld [vmem:[%s1723 + $0xa8] sm:$0xff]
        %v1746 = vld [vmem:[%s1723 + $0xb0] sm:$0xff]
        %v1747 = vld [vmem:[%s1723 + $0xb8] sm:$0xff]
        %v1748 = vld [vmem:[%s1723 + $0xc0] sm:$0xff]
        %v1749 = vld [vmem:[%s1723 + $0xc8] sm:$0xff]
        %v1750 = vld [vmem:[%s1723 + $0xd0] sm:$0xff]
        %v1751 = vld [vmem:[%s1723 + $0xd8] sm:$0xff]
        %v1752 = vld [vmem:[%s1723 + $0xe0] sm:$0xff]
        %v1753 = vld [vmem:[%s1723 + $0xe8] sm:$0xff]
        %v1754 = vld [vmem:[%s1723 + $0xf0] sm:$0xff]
        %v1755 = vld [vmem:[%s1723 + $0xf8] sm:$0xff]
        %v1756 = vld [vmem:[%s1723 + $0x100] sm:$0xff]
        %v1757 = vld [vmem:[%s1723 + $0x108] sm:$0xff]
        %v1758 = vld [vmem:[%s1723 + $0x110] sm:$0xff]
        %v1759 = vld [vmem:[%s1723 + $0x118] sm:$0xff]
        %v1760 = vld [vmem:[%s1723 + $0x120] sm:$0xff]
        %v1761 = vld [vmem:[%s1723 + $0x128] sm:$0xff]
        %v1762 = vld [vmem:[%s1723 + $0x130] sm:$0xff]
        %v1763 = vld [vmem:[%s1723 + $0x138] sm:$0xff]
        %v1764 = vld [vmem:[%s1723 + $0x140] sm:$0xff]
        %v1765 = vld [vmem:[%s1723 + $0x148] sm:$0xff]
        %v1766 = vld [vmem:[%s1723 + $0x150] sm:$0xff]
        %v1767 = vld [vmem:[%s1723 + $0x158] sm:$0xff]
        %v1768 = vld [vmem:[%s1723 + $0x160] sm:$0xff]
        %v1769 = vld [vmem:[%s1723 + $0x168] sm:$0xff]
        %v1770 = vld [vmem:[%s1723 + $0x170] sm:$0xff]
        %v1771 = vld [vmem:[%s1723 + $0x178] sm:$0xff]
        %1772 = vmatprep.subr.mxu0 0.0
        %1773 = vmatpush1.msra.mxu0 %v1724
        %1774 = vmatprep.subr.mxu0 0.0
        %1775 = vmatpush1.msra.mxu0 %v1725
        %1776 = vmatprep.subr.mxu0 0.0
        %1777 = vmatpush1.msra.mxu0 %v1726
        %1778 = vmatprep.subr.mxu0 0.0
        %1779 = vmatpush1.msra.mxu0 %v1727
        %1780 = vmatprep.subr.mxu0 0.0
        %1781 = vmatpush1.msra.mxu0 %v1728
        %1782 = vmatprep.subr.mxu0 0.0
        %1783 = vmatpush1.msra.mxu0 %v1729
        %1784 = vmatprep.subr.mxu0 0.0
        %1785 = vmatpush1.msra.mxu0 %v1730
        %1786 = vmatprep.subr.mxu0 0.0
        %1787 = vmatpush1.msra.mxu0 %v1731
        %1788 = vmatprep.subr.mxu0 0.0
        %1789 = vmatpush1.msra.mxu0 %v1732
        %1790 = vmatprep.subr.mxu0 0.0
        %1791 = vmatpush1.msra.mxu0 %v1733
        %1792 = vmatprep.subr.mxu0 0.0
        %1793 = vmatpush1.msra.mxu0 %v1734
        %1794 = vmatprep.subr.mxu0 0.0
        %1795 = vmatpush1.msra.mxu0 %v1735
        %1796 = vmatprep.subr.mxu0 0.0
        %1797 = vmatpush1.msra.mxu0 %v1736
        %1798 = vmatprep.subr.mxu0 0.0
        %1799 = vmatpush1.msra.mxu0 %v1737
        %1800 = vmatprep.subr.mxu0 0.0
        %1801 = vmatpush1.msra.mxu0 %v1738
        %1802 = vmatprep.subr.mxu0 0.0
        %1803 = vmatpush1.msra.mxu0 %v1739
        %1804 = vmatprep.subr.mxu0 0.0
        %1805 = vmatpush1.msra.mxu0 %v1740
        %1806 = vmatprep.subr.mxu0 0.0
        %1807 = vmatpush1.msra.mxu0 %v1741
        %1808 = vmatprep.subr.mxu0 0.0
        %1809 = vmatpush1.msra.mxu0 %v1742
        %1810 = vmatprep.subr.mxu0 0.0
        %1811 = vmatpush1.msra.mxu0 %v1743
        %1812 = vmatprep.subr.mxu0 0.0
        %1813 = vmatpush1.msra.mxu0 %v1744
        %1814 = vmatprep.subr.mxu0 0.0
        %1815 = vmatpush1.msra.mxu0 %v1745
        %1816 = vmatprep.subr.mxu0 0.0
        %1817 = vmatpush1.msra.mxu0 %v1746
        %1818 = vmatprep.subr.mxu0 0.0
        %1819 = vmatpush1.msra.mxu0 %v1747
        %1820 = vmatprep.subr.mxu0 0.0
        %1821 = vmatpush1.msra.mxu0 %v1748
        %1822 = vmatprep.subr.mxu0 0.0
        %1823 = vmatpush1.msra.mxu0 %v1749
        %1824 = vmatprep.subr.mxu0 0.0
        %1825 = vmatpush1.msra.mxu0 %v1750
        %1826 = vmatprep.subr.mxu0 0.0
        %1827 = vmatpush1.msra.mxu0 %v1751
        %1828 = vmatprep.subr.mxu0 0.0
        %1829 = vmatpush1.msra.mxu0 %v1752
        %1830 = vmatprep.subr.mxu0 0.0
        %1831 = vmatpush1.msra.mxu0 %v1753
        %1832 = vmatprep.subr.mxu0 0.0
        %1833 = vmatpush1.msra.mxu0 %v1754
        %1834 = vmatprep.subr.mxu0 0.0
        %1835 = vmatpush1.msra.mxu0 %v1755
        %1836 = vmatprep.mubr.f32.mxu0 %v325
        %1837 = vmatmul.mubr.f32.gmra.mrb[0].mxu0 %v210
        %v1838 = vpop.f32.mrb[0].mxu0
        %v1839 = vadd.f32 0.0, %v1838
        %v1840 = vpop.f32.mrb[0].mxu0
        %1841 = vmatprep.mubr.f32.mxu0 %v327
        %1842 = vmatmul.mubr.f32.gmra.mrb[0].mxu0 %v211
        %v1843 = vpop.f32.mrb[0].mxu0
        %v1844 = vadd.f32 0.0, %v1843
        %v1845 = vpop.f32.mrb[0].mxu0
        %1846 = vmatprep.mubr.f32.mxu0 %v330
        %1847 = vmatmul.mubr.f32.gmra.mrb[0].mxu0 %v213
        %v1848 = vpop.f32.mrb[0].mxu0
        %v1849 = vadd.f32 0.0, %v1848
        %v1850 = vpop.f32.mrb[0].mxu0
        %1851 = vmatprep.mubr.f32.mxu0 %v332
        %1852 = vmatmul.mubr.f32.gmra.mrb[0].mxu0 %v214
        %v1853 = vpop.f32.mrb[0].mxu0
        %v1854 = vadd.f32 0.0, %v1853
        %v1855 = vpop.f32.mrb[0].mxu0
        %1856 = vmatprep.mubr.f32.mxu0 %v335
        %1857 = vmatmul.mubr.f32.gmra.mrb[0].mxu0 %v216
        %v1858 = vpop.f32.mrb[0].mxu0
        %v1859 = vadd.f32 0.0, %v1858
        %v1860 = vpop.f32.mrb[0].mxu0
        %1861 = vmatprep.mubr.f32.mxu0 %v337
        %1862 = vmatmul.mubr.f32.gmra.mrb[0].mxu0 %v217
        %v1863 = vpop.f32.mrb[0].mxu0
        %v1864 = vadd.f32 0.0, %v1863
        %v1865 = vpop.f32.mrb[0].mxu0
        %1866 = vmatprep.mubr.f32.mxu0 %v340
        %1867 = vmatmul.mubr.f32.gmra.mrb[0].mxu0 %v219
        %v1868 = vpop.f32.mrb[0].mxu0
        %v1869 = vadd.f32 0.0, %v1868
        %v1870 = vpop.f32.mrb[0].mxu0
        %1871 = vmatprep.mubr.f32.mxu0 %v342
        %1872 = vmatmul.mubr.f32.gmra.mrb[0].mxu0 %v220
        %v1873 = vpop.f32.mrb[0].mxu0
        %v1874 = vadd.f32 0.0, %v1873
        %v1875 = vpop.f32.mrb[0].mxu0
        %1876 = vmatprep.mubr.f32.mxu0 %v345
        %1877 = vmatmul.mubr.f32.gmra.mrb[0].mxu0 %v222
        %v1878 = vpop.f32.mrb[0].mxu0
        %v1879 = vadd.f32 0.0, %v1878
        %v1880 = vpop.f32.mrb[0].mxu0
        %1881 = vmatprep.mubr.f32.mxu0 %v347
        %1882 = vmatmul.mubr.f32.gmra.mrb[0].mxu0 %v223
        %v1883 = vpop.f32.mrb[0].mxu0
        %v1884 = vadd.f32 0.0, %v1883
        %v1885 = vpop.f32.mrb[0].mxu0
        %1886 = vmatprep.mubr.f32.mxu0 %v350
        %1887 = vmatmul.mubr.f32.gmra.mrb[0].mxu0 %v225
        %v1888 = vpop.f32.mrb[0].mxu0
        %v1889 = vadd.f32 0.0, %v1888
        %v1890 = vpop.f32.mrb[0].mxu0
        %1891 = vmatprep.mubr.f32.mxu0 %v352
        %1892 = vmatmul.mubr.f32.gmra.mrb[0].mxu0 %v226
        %v1893 = vpop.f32.mrb[0].mxu0
        %v1894 = vadd.f32 0.0, %v1893
        %v1895 = vpop.f32.mrb[0].mxu0
        %1896 = vmatprep.mubr.f32.mxu0 %v355
        %1897 = vmatmul.mubr.f32.gmra.mrb[0].mxu0 %v228
        %v1898 = vpop.f32.mrb[0].mxu0
        %v1899 = vadd.f32 0.0, %v1898
        %v1900 = vpop.f32.mrb[0].mxu0
        %1901 = vmatprep.mubr.f32.mxu0 %v357
        %1902 = vmatmul.mubr.f32.gmra.mrb[0].mxu0 %v229
        %v1903 = vpop.f32.mrb[0].mxu0
        %v1904 = vadd.f32 0.0, %v1903
        %v1905 = vpop.f32.mrb[0].mxu0
        %1906 = vmatprep.mubr.f32.mxu0 %v360
        %1907 = vmatmul.mubr.f32.gmra.mrb[0].mxu0 %v231
        %v1908 = vpop.f32.mrb[0].mxu0
        %v1909 = vadd.f32 0.0, %v1908
        %v1910 = vpop.f32.mrb[0].mxu0
        %1911 = vmatprep.mubr.f32.mxu0 %v362
        %1912 = vmatmul.mubr.f32.gmra.mrb[0].mxu0 %v232
        %v1913 = vpop.f32.mrb[0].mxu0
        %v1914 = vadd.f32 0.0, %v1913
        %v1915 = vpop.f32.mrb[0].mxu0
        %1916 = vmatprep.mubr.f32.mxu0 %v365
        %1917 = vmatmul.mubr.f32.gmra.mrb[0].mxu0 %v234
        %v1918 = vpop.f32.mrb[0].mxu0
        %v1919 = vadd.f32 0.0, %v1918
        %v1920 = vpop.f32.mrb[0].mxu0
        %1921 = vmatprep.mubr.f32.mxu0 %v367
        %1922 = vmatmul.mubr.f32.gmra.mrb[0].mxu0 %v235
        %v1923 = vpop.f32.mrb[0].mxu0
        %v1924 = vadd.f32 0.0, %v1923
        %v1925 = vpop.f32.mrb[0].mxu0
        %1926 = vmatprep.mubr.f32.mxu0 %v370
        %1927 = vmatmul.mubr.f32.gmra.mrb[0].mxu0 %v237
        %v1928 = vpop.f32.mrb[0].mxu0
        %v1929 = vadd.f32 0.0, %v1928
        %v1930 = vpop.f32.mrb[0].mxu0
        %1931 = vmatprep.mubr.f32.mxu0 %v372
        %1932 = vmatmul.mubr.f32.gmra.mrb[0].mxu0 %v238
        %v1933 = vpop.f32.mrb[0].mxu0
        %v1934 = vadd.f32 0.0, %v1933
        %v1935 = vpop.f32.mrb[0].mxu0
        %1936 = vmatprep.mubr.f32.mxu0 %v375
        %1937 = vmatmul.mubr.f32.gmra.mrb[0].mxu0 %v240
        %v1938 = vpop.f32.mrb[0].mxu0
        %v1939 = vadd.f32 0.0, %v1938
        %v1940 = vpop.f32.mrb[0].mxu0
        %1941 = vmatprep.mubr.f32.mxu0 %v377
        %1942 = vmatmul.mubr.f32.gmra.mrb[0].mxu0 %v241
        %v1943 = vpop.f32.mrb[0].mxu0
        %v1944 = vadd.f32 0.0, %v1943
        %v1945 = vpop.f32.mrb[0].mxu0
        %1946 = vmatprep.mubr.f32.mxu0 %v380
        %1947 = vmatmul.mubr.f32.gmra.mrb[0].mxu0 %v243
        %v1948 = vpop.f32.mrb[0].mxu0
        %v1949 = vadd.f32 0.0, %v1948
        %v1950 = vpop.f32.mrb[0].mxu0
        %1951 = vmatprep.mubr.f32.mxu0 %v382
        %1952 = vmatmul.mubr.f32.gmra.mrb[0].mxu0 %v244
        %v1953 = vpop.f32.mrb[0].mxu0
        %v1954 = vadd.f32 0.0, %v1953
        %v1955 = vpop.f32.mrb[0].mxu0
        %1956 = vmatprep.mubr.f32.mxu0 %v385
        %1957 = vmatmul.mubr.f32.gmra.mrb[0].mxu0 %v246
        %v1958 = vpop.f32.mrb[0].mxu0
        %v1959 = vadd.f32 0.0, %v1958
        %v1960 = vpop.f32.mrb[0].mxu0
        %1961 = vmatprep.mubr.f32.mxu0 %v387
        %1962 = vmatmul.mubr.f32.gmra.mrb[0].mxu0 %v247
        %v1963 = vpop.f32.mrb[0].mxu0
        %v1964 = vadd.f32 0.0, %v1963
        %v1965 = vpop.f32.mrb[0].mxu0
        %1966 = vmatprep.mubr.f32.mxu0 %v390
        %1967 = vmatmul.mubr.f32.gmra.mrb[0].mxu0 %v249
        %v1968 = vpop.f32.mrb[0].mxu0
        %v1969 = vadd.f32 0.0, %v1968
        %v1970 = vpop.f32.mrb[0].mxu0
        %1971 = vmatprep.mubr.f32.mxu0 %v392
        %1972 = vmatmul.mubr.f32.gmra.mrb[0].mxu0 %v250
        %v1973 = vpop.f32.mrb[0].mxu0
        %v1974 = vadd.f32 0.0, %v1973
        %v1975 = vpop.f32.mrb[0].mxu0
        %1976 = vmatprep.mubr.f32.mxu0 %v395
        %1977 = vmatmul.mubr.f32.gmra.mrb[0].mxu0 %v252
        %v1978 = vpop.f32.mrb[0].mxu0
        %v1979 = vadd.f32 0.0, %v1978
        %v1980 = vpop.f32.mrb[0].mxu0
        %1981 = vmatprep.mubr.f32.mxu0 %v397
        %1982 = vmatmul.mubr.f32.gmra.mrb[0].mxu0 %v253
        %v1983 = vpop.f32.mrb[0].mxu0
        %v1984 = vadd.f32 0.0, %v1983
        %v1985 = vpop.f32.mrb[0].mxu0
        %1986 = vmatprep.mubr.f32.mxu0 %v400
        %1987 = vmatmul.mubr.f32.gmra.mrb[0].mxu0 %v255
        %v1988 = vpop.f32.mrb[0].mxu0
        %v1989 = vadd.f32 0.0, %v1988
        %v1990 = vpop.f32.mrb[0].mxu0
        %1991 = vmatprep.mubr.f32.mxu0 %v402
        %1992 = vmatmul.mubr.f32.gmra.mrb[0].mxu0 %v256
        %v1993 = vpop.f32.mrb[0].mxu0
        %v1994 = vadd.f32 0.0, %v1993
        %v1995 = vpop.f32.mrb[0].mxu0
        %1996 = vdwg.mxu0
        %1997 = vmatprep.subr.mxu0 0.0
        %1998 = vmatpush1.msra.mxu0 %v1756
        %1999 = vmatprep.subr.mxu0 0.0
        %2000 = vmatpush1.msra.mxu0 %v1757
        %2001 = vmatprep.subr.mxu0 0.0
        %2002 = vmatpush1.msra.mxu0 %v1758
        %2003 = vmatprep.subr.mxu0 0.0
        %2004 = vmatpush1.msra.mxu0 %v1759
        %2005 = vmatprep.subr.mxu0 0.0
        %2006 = vmatpush1.msra.mxu0 %v1760
        %2007 = vmatprep.subr.mxu0 0.0
        %2008 = vmatpush1.msra.mxu0 %v1761
        %2009 = vmatprep.subr.mxu0 0.0
        %2010 = vmatpush1.msra.mxu0 %v1762
        %2011 = vmatprep.subr.mxu0 0.0
        %2012 = vmatpush1.msra.mxu0 %v1763
        %2013 = vmatprep.subr.mxu0 0.0
        %2014 = vmatpush1.msra.mxu0 %v1764
        %2015 = vmatprep.subr.mxu0 0.0
        %2016 = vmatpush1.msra.mxu0 %v1765
        %2017 = vmatprep.subr.mxu0 0.0
        %2018 = vmatpush1.msra.mxu0 %v1766
        %2019 = vmatprep.subr.mxu0 0.0
        %2020 = vmatpush1.msra.mxu0 %v1767
        %2021 = vmatprep.subr.mxu0 0.0
        %2022 = vmatpush1.msra.mxu0 %v1768
        %2023 = vmatprep.subr.mxu0 0.0
        %2024 = vmatpush1.msra.mxu0 %v1769
        %2025 = vmatprep.subr.mxu0 0.0
        %2026 = vmatpush1.msra.mxu0 %v1770
        %2027 = vmatprep.subr.mxu0 0.0
        %2028 = vmatpush1.msra.mxu0 %v1771
        %2029 = vmatprep.subr.mxu0 0.0
        %2030 = vmatpush1.msra.mxu0 0.0
        %2031 = vmatprep.subr.mxu0 0.0
        %2032 = vmatpush1.msra.mxu0 0.0
        %2033 = vmatprep.subr.mxu0 0.0
        %2034 = vmatpush1.msra.mxu0 0.0
        %2035 = vmatprep.subr.mxu0 0.0
        %2036 = vmatpush1.msra.mxu0 0.0
        %2037 = vmatprep.subr.mxu0 0.0
        %2038 = vmatpush1.msra.mxu0 0.0
        %2039 = vmatprep.subr.mxu0 0.0
        %2040 = vmatpush1.msra.mxu0 0.0
        %2041 = vmatprep.subr.mxu0 0.0
        %2042 = vmatpush1.msra.mxu0 0.0
        %2043 = vmatprep.subr.mxu0 0.0
        %2044 = vmatpush1.msra.mxu0 0.0
        %2045 = vmatprep.subr.mxu0 0.0
        %2046 = vmatpush1.msra.mxu0 0.0
        %2047 = vmatprep.subr.mxu0 0.0
        %2048 = vmatpush1.msra.mxu0 0.0
        %2049 = vmatprep.subr.mxu0 0.0
        %2050 = vmatpush1.msra.mxu0 0.0
        %2051 = vmatprep.subr.mxu0 0.0
        %2052 = vmatpush1.msra.mxu0 0.0
        %2053 = vmatprep.subr.mxu0 0.0
        %2054 = vmatpush1.msra.mxu0 0.0
        %2055 = vmatprep.subr.mxu0 0.0
        %2056 = vmatpush1.msra.mxu0 0.0
        %2057 = vmatprep.subr.mxu0 0.0
        %2058 = vmatpush1.msra.mxu0 0.0
        %2059 = vmatprep.subr.mxu0 0.0
        %2060 = vmatpush1.msra.mxu0 0.0
        %2061 = vmatprep.mubr.f32.mxu0 0.0
        %2062 = vmatmul.mubr.f32.gmra.mrb[0].mxu0 %v452
        %v2063 = vpop.f32.mrb[0].mxu0
        %v2064 = vadd.f32 %v1839, %v2063
        %v2065 = vpop.f32.mrb[0].mxu0
        %2066 = vmatprep.mubr.f32.mxu0 0.0
        %2067 = vmatmul.mubr.f32.gmra.mrb[0].mxu0 %v454
        %v2068 = vpop.f32.mrb[0].mxu0
        %v2069 = vadd.f32 %v1844, %v2068
        %v2070 = vpop.f32.mrb[0].mxu0
        %2071 = vmatprep.mubr.f32.mxu0 0.0
        %2072 = vmatmul.mubr.f32.gmra.mrb[0].mxu0 %v457
        %v2073 = vpop.f32.mrb[0].mxu0
        %v2074 = vadd.f32 %v1849, %v2073
        %v2075 = vpop.f32.mrb[0].mxu0
        %2076 = vmatprep.mubr.f32.mxu0 0.0
        %2077 = vmatmul.mubr.f32.gmra.mrb[0].mxu0 %v459
        %v2078 = vpop.f32.mrb[0].mxu0
        %v2079 = vadd.f32 %v1854, %v2078
        %v2080 = vpop.f32.mrb[0].mxu0
        %2081 = vmatprep.mubr.f32.mxu0 0.0
        %2082 = vmatmul.mubr.f32.gmra.mrb[0].mxu0 %v462
        %v2083 = vpop.f32.mrb[0].mxu0
        %v2084 = vadd.f32 %v1859, %v2083
        %v2085 = vpop.f32.mrb[0].mxu0
        %2086 = vmatprep.mubr.f32.mxu0 0.0
        %2087 = vmatmul.mubr.f32.gmra.mrb[0].mxu0 %v464
        %v2088 = vpop.f32.mrb[0].mxu0
        %v2089 = vadd.f32 %v1864, %v2088
        %v2090 = vpop.f32.mrb[0].mxu0
        %2091 = vmatprep.mubr.f32.mxu0 0.0
        %2092 = vmatmul.mubr.f32.gmra.mrb[0].mxu0 %v467
        %v2093 = vpop.f32.mrb[0].mxu0
        %v2094 = vadd.f32 %v1869, %v2093
        %v2095 = vpop.f32.mrb[0].mxu0
        %2096 = vmatprep.mubr.f32.mxu0 0.0
        %2097 = vmatmul.mubr.f32.gmra.mrb[0].mxu0 %v469
        %v2098 = vpop.f32.mrb[0].mxu0
        %v2099 = vadd.f32 %v1874, %v2098
        %v2100 = vpop.f32.mrb[0].mxu0
        %2101 = vmatprep.mubr.f32.mxu0 0.0
        %2102 = vmatmul.mubr.f32.gmra.mrb[0].mxu0 %v472
        %v2103 = vpop.f32.mrb[0].mxu0
        %v2104 = vadd.f32 %v1879, %v2103
        %v2105 = vpop.f32.mrb[0].mxu0
        %2106 = vmatprep.mubr.f32.mxu0 0.0
        %2107 = vmatmul.mubr.f32.gmra.mrb[0].mxu0 %v474
        %v2108 = vpop.f32.mrb[0].mxu0
        %v2109 = vadd.f32 %v1884, %v2108
        %v2110 = vpop.f32.mrb[0].mxu0
        %2111 = vmatprep.mubr.f32.mxu0 0.0
        %2112 = vmatmul.mubr.f32.gmra.mrb[0].mxu0 %v477
        %v2113 = vpop.f32.mrb[0].mxu0
        %v2114 = vadd.f32 %v1889, %v2113
        %v2115 = vpop.f32.mrb[0].mxu0
        %2116 = vmatprep.mubr.f32.mxu0 0.0
        %2117 = vmatmul.mubr.f32.gmra.mrb[0].mxu0 %v479
        %v2118 = vpop.f32.mrb[0].mxu0
        %v2119 = vadd.f32 %v1894, %v2118
        %v2120 = vpop.f32.mrb[0].mxu0
        %2121 = vmatprep.mubr.f32.mxu0 0.0
        %2122 = vmatmul.mubr.f32.gmra.mrb[0].mxu0 %v482
        %v2123 = vpop.f32.mrb[0].mxu0
        %v2124 = vadd.f32 %v1899, %v2123
        %v2125 = vpop.f32.mrb[0].mxu0
        %2126 = vmatprep.mubr.f32.mxu0 0.0
        %2127 = vmatmul.mubr.f32.gmra.mrb[0].mxu0 %v484
        %v2128 = vpop.f32.mrb[0].mxu0
        %v2129 = vadd.f32 %v1904, %v2128
        %v2130 = vpop.f32.mrb[0].mxu0
        %2131 = vmatprep.mubr.f32.mxu0 0.0
        %2132 = vmatmul.mubr.f32.gmra.mrb[0].mxu0 %v487
        %v2133 = vpop.f32.mrb[0].mxu0
        %v2134 = vadd.f32 %v1909, %v2133
        %v2135 = vpop.f32.mrb[0].mxu0
        %2136 = vmatprep.mubr.f32.mxu0 0.0
        %2137 = vmatmul.mubr.f32.gmra.mrb[0].mxu0 %v489
        %v2138 = vpop.f32.mrb[0].mxu0
        %v2139 = vadd.f32 %v1914, %v2138
        %v2140 = vpop.f32.mrb[0].mxu0
        %2141 = vmatprep.mubr.f32.mxu0 0.0
        %2142 = vmatmul.mubr.f32.gmra.mrb[0].mxu0 %v492
        %v2143 = vpop.f32.mrb[0].mxu0
        %v2144 = vadd.f32 %v1919, %v2143
        %v2145 = vpop.f32.mrb[0].mxu0
        %2146 = vmatprep.mubr.f32.mxu0 0.0
        %2147 = vmatmul.mubr.f32.gmra.mrb[0].mxu0 %v494
        %v2148 = vpop.f32.mrb[0].mxu0
        %v2149 = vadd.f32 %v1924, %v2148
        %v2150 = vpop.f32.mrb[0].mxu0
        %2151 = vmatprep.mubr.f32.mxu0 0.0
        %2152 = vmatmul.mubr.f32.gmra.mrb[0].mxu0 %v497
        %v2153 = vpop.f32.mrb[0].mxu0
        %v2154 = vadd.f32 %v1929, %v2153
        %v2155 = vpop.f32.mrb[0].mxu0
        %2156 = vmatprep.mubr.f32.mxu0 0.0
        %2157 = vmatmul.mubr.f32.gmra.mrb[0].mxu0 %v499
        %v2158 = vpop.f32.mrb[0].mxu0
        %v2159 = vadd.f32 %v1934, %v2158
        %v2160 = vpop.f32.mrb[0].mxu0
        %2161 = vmatprep.mubr.f32.mxu0 0.0
        %2162 = vmatmul.mubr.f32.gmra.mrb[0].mxu0 %v502
        %v2163 = vpop.f32.mrb[0].mxu0
        %v2164 = vadd.f32 %v1939, %v2163
        %v2165 = vpop.f32.mrb[0].mxu0
        %2166 = vmatprep.mubr.f32.mxu0 0.0
        %2167 = vmatmul.mubr.f32.gmra.mrb[0].mxu0 %v504
        %v2168 = vpop.f32.mrb[0].mxu0
        %v2169 = vadd.f32 %v1944, %v2168
        %v2170 = vpop.f32.mrb[0].mxu0
        %2171 = vmatprep.mubr.f32.mxu0 0.0
        %2172 = vmatmul.mubr.f32.gmra.mrb[0].mxu0 %v507
        %v2173 = vpop.f32.mrb[0].mxu0
        %v2174 = vadd.f32 %v1949, %v2173
        %v2175 = vpop.f32.mrb[0].mxu0
        %2176 = vmatprep.mubr.f32.mxu0 0.0
        %2177 = vmatmul.mubr.f32.gmra.mrb[0].mxu0 %v509
        %v2178 = vpop.f32.mrb[0].mxu0
        %v2179 = vadd.f32 %v1954, %v2178
        %v2180 = vpop.f32.mrb[0].mxu0
        %2181 = vmatprep.mubr.f32.mxu0 0.0
        %2182 = vmatmul.mubr.f32.gmra.mrb[0].mxu0 %v512
        %v2183 = vpop.f32.mrb[0].mxu0
        %v2184 = vadd.f32 %v1959, %v2183
        %v2185 = vpop.f32.mrb[0].mxu0
        %2186 = vmatprep.mubr.f32.mxu0 0.0
        %2187 = vmatmul.mubr.f32.gmra.mrb[0].mxu0 %v514
        %v2188 = vpop.f32.mrb[0].mxu0
        %v2189 = vadd.f32 %v1964, %v2188
        %v2190 = vpop.f32.mrb[0].mxu0
        %2191 = vmatprep.mubr.f32.mxu0 0.0
        %2192 = vmatmul.mubr.f32.gmra.mrb[0].mxu0 %v517
        %v2193 = vpop.f32.mrb[0].mxu0
        %v2194 = vadd.f32 %v1969, %v2193
        %v2195 = vpop.f32.mrb[0].mxu0
        %2196 = vmatprep.mubr.f32.mxu0 0.0
        %2197 = vmatmul.mubr.f32.gmra.mrb[0].mxu0 %v519
        %v2198 = vpop.f32.mrb[0].mxu0
        %v2199 = vadd.f32 %v1974, %v2198
        %v2200 = vpop.f32.mrb[0].mxu0
        %2201 = vmatprep.mubr.f32.mxu0 0.0
        %2202 = vmatmul.mubr.f32.gmra.mrb[0].mxu0 %v522
        %v2203 = vpop.f32.mrb[0].mxu0
        %v2204 = vadd.f32 %v1979, %v2203
        %v2205 = vpop.f32.mrb[0].mxu0
        %2206 = vmatprep.mubr.f32.mxu0 0.0
        %2207 = vmatmul.mubr.f32.gmra.mrb[0].mxu0 %v524
        %v2208 = vpop.f32.mrb[0].mxu0
        %v2209 = vadd.f32 %v1984, %v2208
        %v2210 = vpop.f32.mrb[0].mxu0
        %2211 = vmatprep.mubr.f32.mxu0 0.0
        %2212 = vmatmul.mubr.f32.gmra.mrb[0].mxu0 %v527
        %v2213 = vpop.f32.mrb[0].mxu0
        %v2214 = vadd.f32 %v1989, %v2213
        %v2215 = vpop.f32.mrb[0].mxu0
        %2216 = vmatprep.mubr.f32.mxu0 0.0
        %2217 = vmatmul.mubr.f32.gmra.mrb[0].mxu0 %v529
        %v2218 = vpop.f32.mrb[0].mxu0
        %v2219 = vadd.f32 %v1994, %v2218
        %v2220 = vpop.f32.mrb[0].mxu0
        %2221 = vdwg.mxu0
        %v2222 = vadd.f32 %v1691, %v2064
        %v2223 = vadd.f32 %v1692, %v2069
        %v2224 = vadd.f32 %v1693, %v2074
        %v2225 = vadd.f32 %v1694, %v2079
        %v2226 = vadd.f32 %v1695, %v2084
        %v2227 = vadd.f32 %v1696, %v2089
        %v2228 = vadd.f32 %v1697, %v2094
        %v2229 = vadd.f32 %v1698, %v2099
        %v2230 = vadd.f32 %v1699, %v2104
        %v2231 = vadd.f32 %v1700, %v2109
        %v2232 = vadd.f32 %v1701, %v2114
        %v2233 = vadd.f32 %v1702, %v2119
        %v2234 = vadd.f32 %v1703, %v2124
        %v2235 = vadd.f32 %v1704, %v2129
        %v2236 = vadd.f32 %v1705, %v2134
        %v2237 = vadd.f32 %v1706, %v2139
        %v2238 = vadd.f32 %v1707, %v2144
        %v2239 = vadd.f32 %v1708, %v2149
        %v2240 = vadd.f32 %v1709, %v2154
        %v2241 = vadd.f32 %v1710, %v2159
        %v2242 = vadd.f32 %v1711, %v2164
        %v2243 = vadd.f32 %v1712, %v2169
        %v2244 = vadd.f32 %v1713, %v2174
        %v2245 = vadd.f32 %v1714, %v2179
        %v2246 = vadd.f32 %v1715, %v2184
        %v2247 = vadd.f32 %v1716, %v2189
        %v2248 = vadd.f32 %v1717, %v2194
        %v2249 = vadd.f32 %v1718, %v2199
        %v2250 = vadd.f32 %v1719, %v2204
        %v2251 = vadd.f32 %v1720, %v2209
        %v2252 = vadd.f32 %v1721, %v2214
        %v2253 = vadd.f32 %v1722, %v2219
        %2254 = vst [vmem:[#allocation2] sm:$0xff] %v2222
        %2255 = vst [vmem:[#allocation2 + $0x8] sm:$0xff] %v2223
        %2256 = vst [vmem:[#allocation2 + $0x10] sm:$0xff] %v2224
        %2257 = vst [vmem:[#allocation2 + $0x18] sm:$0xff] %v2225
        %2258 = vst [vmem:[#allocation2 + $0x20] sm:$0xff] %v2226
        %2259 = vst [vmem:[#allocation2 + $0x28] sm:$0xff] %v2227
        %2260 = vst [vmem:[#allocation2 + $0x30] sm:$0xff] %v2228
        %2261 = vst [vmem:[#allocation2 + $0x38] sm:$0xff] %v2229
        %2262 = vst [vmem:[#allocation2 + $0x40] sm:$0xff] %v2230
        %2263 = vst [vmem:[#allocation2 + $0x48] sm:$0xff] %v2231
        %2264 = vst [vmem:[#allocation2 + $0x50] sm:$0xff] %v2232
        %2265 = vst [vmem:[#allocation2 + $0x58] sm:$0xff] %v2233
        %2266 = vst [vmem:[#allocation2 + $0x60] sm:$0xff] %v2234
        %2267 = vst [vmem:[#allocation2 + $0x68] sm:$0xff] %v2235
        %2268 = vst [vmem:[#allocation2 + $0x70] sm:$0xff] %v2236
        %2269 = vst [vmem:[#allocation2 + $0x78] sm:$0xff] %v2237
        %2270 = vst [vmem:[#allocation2 + $0x80] sm:$0xff] %v2238
        %2271 = vst [vmem:[#allocation2 + $0x88] sm:$0xff] %v2239
        %2272 = vst [vmem:[#allocation2 + $0x90] sm:$0xff] %v2240
        %2273 = vst [vmem:[#allocation2 + $0x98] sm:$0xff] %v2241
        %2274 = vst [vmem:[#allocation2 + $0xa0] sm:$0xff] %v2242
        %2275 = vst [vmem:[#allocation2 + $0xa8] sm:$0xff] %v2243
        %2276 = vst [vmem:[#allocation2 + $0xb0] sm:$0xff] %v2244
        %2277 = vst [vmem:[#allocation2 + $0xb8] sm:$0xff] %v2245
        %2278 = vst [vmem:[#allocation2 + $0xc0] sm:$0xff] %v2246
        %2279 = vst [vmem:[#allocation2 + $0xc8] sm:$0xff] %v2247
        %2280 = vst [vmem:[#allocation2 + $0xd0] sm:$0xff] %v2248
        %2281 = vst [vmem:[#allocation2 + $0xd8] sm:$0xff] %v2249
        %2282 = vst [vmem:[#allocation2 + $0xe0] sm:$0xff] %v2250
        %2283 = vst [vmem:[#allocation2 + $0xe8] sm:$0xff] %v2251
        %2284 = vst [vmem:[#allocation2 + $0xf0] sm:$0xff] %v2252
        %2285 = vst [vmem:[#allocation2 + $0xf8] sm:$0xff] %v2253
        %v2286 = vld [vmem:[#allocation2] sm:$0xff]
        %v2287 = vld [vmem:[#allocation2 + $0x8] sm:$0xff]
        %v2288 = vld [vmem:[#allocation2 + $0x10] sm:$0xff]
        %v2289 = vld [vmem:[#allocation2 + $0x18] sm:$0xff]
        %v2290 = vld [vmem:[#allocation2 + $0x20] sm:$0xff]
        %v2291 = vld [vmem:[#allocation2 + $0x28] sm:$0xff]
        %v2292 = vld [vmem:[#allocation2 + $0x30] sm:$0xff]
        %v2293 = vld [vmem:[#allocation2 + $0x38] sm:$0xff]
        %v2294 = vld [vmem:[#allocation2 + $0x40] sm:$0xff]
        %v2295 = vld [vmem:[#allocation2 + $0x48] sm:$0xff]
        %v2296 = vld [vmem:[#allocation2 + $0x50] sm:$0xff]
        %v2297 = vld [vmem:[#allocation2 + $0x58] sm:$0xff]
        %v2298 = vld [vmem:[#allocation2 + $0x60] sm:$0xff]
        %v2299 = vld [vmem:[#allocation2 + $0x68] sm:$0xff]
        %v2300 = vld [vmem:[#allocation2 + $0x70] sm:$0xff]
        %v2301 = vld [vmem:[#allocation2 + $0x78] sm:$0xff]
        %v2302 = vld [vmem:[#allocation2 + $0x80] sm:$0xff]
        %v2303 = vld [vmem:[#allocation2 + $0x88] sm:$0xff]
        %v2304 = vld [vmem:[#allocation2 + $0x90] sm:$0xff]
        %v2305 = vld [vmem:[#allocation2 + $0x98] sm:$0xff]
        %v2306 = vld [vmem:[#allocation2 + $0xa0] sm:$0xff]
        %v2307 = vld [vmem:[#allocation2 + $0xa8] sm:$0xff]
        %v2308 = vld [vmem:[#allocation2 + $0xb0] sm:$0xff]
        %v2309 = vld [vmem:[#allocation2 + $0xb8] sm:$0xff]
        %v2310 = vld [vmem:[#allocation2 + $0xc0] sm:$0xff]
        %v2311 = vld [vmem:[#allocation2 + $0xc8] sm:$0xff]
        %v2312 = vld [vmem:[#allocation2 + $0xd0] sm:$0xff]
        %v2313 = vld [vmem:[#allocation2 + $0xd8] sm:$0xff]
        %v2314 = vld [vmem:[#allocation2 + $0xe0] sm:$0xff]
        %v2315 = vld [vmem:[#allocation2 + $0xe8] sm:$0xff]
        %v2316 = vld [vmem:[#allocation2 + $0xf0] sm:$0xff]
        %v2317 = vld [vmem:[#allocation2 + $0xf8] sm:$0xff]
        %v2318 = vld [vmem:[%s2] sm:$0x1]
        %v2320 = vlaneseq
        %v2321 = vshrl.u32 %v2320, 7
        %v2322 = vsub.s32 0, %v2321
        %v2323 = vrot.slane %v2318, %v2322
        %v2325 = vadd.f32 %v2286, %v2323
        %v2326 = vadd.f32 %v2287, %v2323
        %v2327 = vadd.f32 %v2288, %v2323
        %v2328 = vadd.f32 %v2289, %v2323
        %v2329 = vadd.f32 %v2290, %v2323
        %v2330 = vadd.f32 %v2291, %v2323
        %v2331 = vadd.f32 %v2292, %v2323
        %v2332 = vadd.f32 %v2293, %v2323
        %v2333 = vadd.f32 %v2294, %v2323
        %v2334 = vadd.f32 %v2295, %v2323
        %v2335 = vadd.f32 %v2296, %v2323
        %v2336 = vadd.f32 %v2297, %v2323
        %v2337 = vadd.f32 %v2298, %v2323
        %v2338 = vadd.f32 %v2299, %v2323
        %v2339 = vadd.f32 %v2300, %v2323
        %v2340 = vadd.f32 %v2301, %v2323
        %v2341 = vadd.f32 %v2302, %v2323
        %v2342 = vadd.f32 %v2303, %v2323
        %v2343 = vadd.f32 %v2304, %v2323
        %v2344 = vadd.f32 %v2305, %v2323
        %v2345 = vadd.f32 %v2306, %v2323
        %v2346 = vadd.f32 %v2307, %v2323
        %v2347 = vadd.f32 %v2308, %v2323
        %v2348 = vadd.f32 %v2309, %v2323
        %v2349 = vadd.f32 %v2310, %v2323
        %v2350 = vadd.f32 %v2311, %v2323
        %v2351 = vadd.f32 %v2312, %v2323
        %v2352 = vadd.f32 %v2313, %v2323
        %v2353 = vadd.f32 %v2314, %v2323
        %v2354 = vadd.f32 %v2315, %v2323
        %v2355 = vadd.f32 %v2316, %v2323
        %v2356 = vadd.f32 %v2317, %v2323
        %v2357 = vadd.f32 %v2325, %v320
        %v2358 = vadd.f32 %v2326, %v322
        %v2359 = vadd.f32 %v2327, %v325
        %v2360 = vadd.f32 %v2328, %v327
        %v2361 = vadd.f32 %v2329, %v330
        %v2362 = vadd.f32 %v2330, %v332
        %v2363 = vadd.f32 %v2331, %v335
        %v2364 = vadd.f32 %v2332, %v337
        %v2365 = vadd.f32 %v2333, %v340
        %v2366 = vadd.f32 %v2334, %v342
        %v2367 = vadd.f32 %v2335, %v345
        %v2368 = vadd.f32 %v2336, %v347
        %v2369 = vadd.f32 %v2337, %v350
        %v2370 = vadd.f32 %v2338, %v352
        %v2371 = vadd.f32 %v2339, %v355
        %v2372 = vadd.f32 %v2340, %v357
        %v2373 = vadd.f32 %v2341, %v360
        %v2374 = vadd.f32 %v2342, %v362
        %v2375 = vadd.f32 %v2343, %v365
        %v2376 = vadd.f32 %v2344, %v367
        %v2377 = vadd.f32 %v2345, %v370
        %v2378 = vadd.f32 %v2346, %v372
        %v2379 = vadd.f32 %v2347, %v375
        %v2380 = vadd.f32 %v2348, %v377
        %v2381 = vadd.f32 %v2349, %v380
        %v2382 = vadd.f32 %v2350, %v382
        %v2383 = vadd.f32 %v2351, %v385
        %v2384 = vadd.f32 %v2352, %v387
        %v2385 = vadd.f32 %v2353, %v390
        %v2386 = vadd.f32 %v2354, %v392
        %v2387 = vadd.f32 %v2355, %v395
        %v2388 = vadd.f32 %v2356, %v397
        %v2389 = vmax.f32 %v2357, 0.0
        %v2390 = vmax.f32 %v2358, 0.0
        %v2391 = vmax.f32 %v2359, 0.0
        %v2392 = vmax.f32 %v2360, 0.0
        %v2393 = vmax.f32 %v2361, 0.0
        %v2394 = vmax.f32 %v2362, 0.0
        %v2395 = vmax.f32 %v2363, 0.0
        %v2396 = vmax.f32 %v2364, 0.0
        %v2397 = vmax.f32 %v2365, 0.0
        %v2398 = vmax.f32 %v2366, 0.0
        %v2399 = vmax.f32 %v2367, 0.0
        %v2400 = vmax.f32 %v2368, 0.0
        %v2401 = vmax.f32 %v2369, 0.0
        %v2402 = vmax.f32 %v2370, 0.0
        %v2403 = vmax.f32 %v2371, 0.0
        %v2404 = vmax.f32 %v2372, 0.0
        %v2405 = vmax.f32 %v2373, 0.0
        %v2406 = vmax.f32 %v2374, 0.0
        %v2407 = vmax.f32 %v2375, 0.0
        %v2408 = vmax.f32 %v2376, 0.0
        %v2409 = vmax.f32 %v2377, 0.0
        %v2410 = vmax.f32 %v2378, 0.0
        %v2411 = vmax.f32 %v2379, 0.0
        %v2412 = vmax.f32 %v2380, 0.0
        %v2413 = vmax.f32 %v2381, 0.0
        %v2414 = vmax.f32 %v2382, 0.0
        %v2415 = vmax.f32 %v2383, 0.0
        %v2416 = vmax.f32 %v2384, 0.0
        %v2417 = vmax.f32 %v2385, 0.0
        %v2418 = vmax.f32 %v2386, 0.0
        %v2419 = vmax.f32 %v2387, 0.0
        %v2420 = vmax.f32 %v2388, 0.0
        %2421 = vst [vmem:[%s203] sm:$0xff] %v2389
        %2422 = vst [vmem:[%s203 + $0x8] sm:$0xff] %v2390
        %2423 = vst [vmem:[%s203 + $0x10] sm:$0xff] %v2391
        %2424 = vst [vmem:[%s203 + $0x18] sm:$0xff] %v2392
        %2425 = vst [vmem:[%s203 + $0x20] sm:$0xff] %v2393
        %2426 = vst [vmem:[%s203 + $0x28] sm:$0xff] %v2394
        %2427 = vst [vmem:[%s203 + $0x30] sm:$0xff] %v2395
        %2428 = vst [vmem:[%s203 + $0x38] sm:$0xff] %v2396
        %2429 = vst [vmem:[%s203 + $0x40] sm:$0xff] %v2397
        %2430 = vst [vmem:[%s203 + $0x48] sm:$0xff] %v2398
        %2431 = vst [vmem:[%s203 + $0x50] sm:$0xff] %v2399
        %2432 = vst [vmem:[%s203 + $0x58] sm:$0xff] %v2400
        %2433 = vst [vmem:[%s203 + $0x60] sm:$0xff] %v2401
        %2434 = vst [vmem:[%s203 + $0x68] sm:$0xff] %v2402
        %2435 = vst [vmem:[%s203 + $0x70] sm:$0xff] %v2403
        %2436 = vst [vmem:[%s203 + $0x78] sm:$0xff] %v2404
        %2437 = vst [vmem:[%s203 + $0x80] sm:$0xff] %v2405
        %2438 = vst [vmem:[%s203 + $0x88] sm:$0xff] %v2406
        %2439 = vst [vmem:[%s203 + $0x90] sm:$0xff] %v2407
        %2440 = vst [vmem:[%s203 + $0x98] sm:$0xff] %v2408
        %2441 = vst [vmem:[%s203 + $0xa0] sm:$0xff] %v2409
        %2442 = vst [vmem:[%s203 + $0xa8] sm:$0xff] %v2410
        %2443 = vst [vmem:[%s203 + $0xb0] sm:$0xff] %v2411
        %2444 = vst [vmem:[%s203 + $0xb8] sm:$0xff] %v2412
        %2445 = vst [vmem:[%s203 + $0xc0] sm:$0xff] %v2413
        %2446 = vst [vmem:[%s203 + $0xc8] sm:$0xff] %v2414
        %2447 = vst [vmem:[%s203 + $0xd0] sm:$0xff] %v2415
        %2448 = vst [vmem:[%s203 + $0xd8] sm:$0xff] %v2416
        %2449 = vst [vmem:[%s203 + $0xe0] sm:$0xff] %v2417
        %2450 = vst [vmem:[%s203 + $0xe8] sm:$0xff] %v2418
        %2451 = vst [vmem:[%s203 + $0xf0] sm:$0xff] %v2419
        %2452 = vst [vmem:[%s203 + $0xf8] sm:$0xff] %v2420
        %s2453 = sand.u32 %s97, 1
        %s2454 = scalar_lea.sflag [#allocation5], %s2453
        %s2455 = sand.u32 %s97, 1
        %s2456 = smul.addr %s2455, 256
        %s2457 = scalar_lea.vmem [#allocation8], %s2456
        // Predicated region
        $region41: #{tpu_custom_call.1} parent=31 // pred_check
          %p2458 = pneg %p107
        $region42: #{tpu_custom_call.1} parent=31 // pred_check_branch
          %2460 = sbr.rel (%p2458) target = $region44
        $region43: #{tpu_custom_call.1} parent=31 // pred_region
          %s2462 = ssub.s32 4096, 4096
          %2463 = vsyncadd %s2454, %s2462
          %s2464 = smul.addr %s21, 32
          %s2465 = smul.addr %s2464, 128
          %s2466 = scalar_lea.hbm %s3, %s2465
          %s2467 = sshll.u32 %s2457, 4
          %s2468 = int_to_ptr.vmem [resolvable:$true] %s2467
          %2473 = dma.vmem_to_hbm [thread:$0]  %s2468, 4096, %s2466, %s2454, 128, 128, 8
        $region44: #{tpu_custom_call.1} parent=31 // pred_fallthru
          _
      $region32: #{tpu_custom_call.1} parent=5 // pred_fallthru
        _
      %p2474 = scmp.le.s32.totalorder 2, %s16
      // Predicated region
      $region45: #{tpu_custom_call.1} parent=5 // pred_check
        %p2475 = pneg %p2474
      $region46: #{tpu_custom_call.1} parent=5 // pred_check_branch
        %2477 = sbr.rel (%p2475) target = $region48
      $region47: #{tpu_custom_call.1} parent=5 // pred_region
        %s2478 = ssub.s32 %s16, 2
        // Predicated region
        $region49: #{tpu_custom_call.1} parent=47 // pred_check
          %p2479 = pneg %p113
        $region50: #{tpu_custom_call.1} parent=47 // pred_check_branch
          %2481 = sbr.rel (%p2479) target = $region52
        $region51: #{tpu_custom_call.1} parent=47 // pred_region
          %s2482 = sand.u32 %s98, 1
          %s2483 = scalar_lea.sflag [#allocation5], %s2482
          %s2484 = sand.u32 %s98, 1
          %s2485 = smul.addr %s2484, 256
          %s2486 = scalar_lea.vmem [#allocation8], %s2485
          %2487 = dma.done %s2483, 4096
        $region52: #{tpu_custom_call.1} parent=47 // pred_fallthru
          _
      $region48: #{tpu_custom_call.1} parent=5 // pred_fallthru
        _
    $region6: #{tpu_custom_call.1} parent=1 // loop_footer
      %s20 = sadd.s32 1, %s16
    $region7: #{tpu_custom_call.1} parent=1 // loop_footer_branch
      %15 = sbr.rel target = $region3
    $region8: #{tpu_custom_call.1} parent=1 // loop_exit
      _
    %2488 = vsyncpa [#allocation4], 1
    %s2489 = scalar_lea.sflag [#allocation4], 1
    %2490 = vsyncpa %s2489, 1
    %2491 = vsyncpa [#allocation7], 1
    %2492 = vsyncpa [#allocation5], 1
    %s2493 = scalar_lea.sflag [#allocation5], 1
    %2494 = vsyncpa %s2493, 1

</llo_original>
